<compile_context>
chip_gen: v7x
topology: tpu7x:2x2x1
jax: 0.10.0
libtpu: 0.0.40
codegen_flags: <defaults>
</compile_context>

<pallas_src>
import functools

import jax
import jax.numpy as jnp
from jax.experimental import pallas as pl
from jax.experimental.pallas import tpu as pltpu


def _round_up(x: int, m: int) -> int:
    return ((x + m - 1) // m) * m


def _vmem_capacity_bytes() -> int:
    """Per-core VMEM capacity; conservative fallback if the query fails."""
    try:
        cap = int(pltpu.get_tpu_info().vmem_capacity_bytes)
        if cap > 0:
            return cap
    except Exception:
        pass
    return 64 << 20  # v7x physical per-TC VMEM (smallest of the three gens)


def _meta_transformer_kernel(z_ref, pcat_ref, qcat_ref, out_ref, acc_ref, *, H, N):
    """One (batch_block, layer) grid step.

    z_ref    : (bb, n_pad, d_pad)         input tokens (read only at layer 0)
    pcat_ref : (1, H*d_pad, d_pad)        vertical stack of Pf_h / N, layer l
    qcat_ref : (1, H*d_pad, d_pad)        vertical stack of Qf_h,     layer l
    out_ref  : (bb, n_pad, d_pad)         written at the last layer only
    acc_ref  : (bb, n_pad, d_pad) f32     resident Z accumulator across layers
    """
    layer = pl.program_id(1)
    n_layers = pl.num_programs(1)

    bb, n_pad, d_pad = acc_ref.shape
    cdt = pcat_ref.dtype  # MXU feed dtype (bf16 caller -> bf16 MXU, f32 -> f32)

    @pl.when(layer == 0)
    def _():
        acc_ref[...] = z_ref[...].astype(jnp.float32)

    Zc = acc_ref[...].astype(cdt)  # (bb, n_pad, d_pad)

    # Gram matrix with the A-mask as an exact rank-1 correction:
    #   G = Z^T (A Z) = Z^T Z - z_q z_q^T   (A zeroes only the query row N;
    #   padded rows of Z are exact zeros, so they contribute nothing).
    G = jnp.einsum('bni,bnk->bik', Zc, Zc, preferred_element_type=jnp.float32)
    zq = Zc[:, N, :].astype(jnp.float32)                 # (bb, d_pad) query row
    G = G - zq[:, :, None] * zq[:, None, :]

    # Head mixing, step 1 (wide): GPall[:, :, h*d+l] = (G @ Pf_h^T / N)[:, l]
    # — a single matmul with output width H*d_pad (256-wide MXU friendly).
    Gc = G.astype(cdt)
    GPall = jnp.einsum('bjk,ak->bja', Gc, pcat_ref[0],
                       preferred_element_type=jnp.float32)
    GPc = GPall.astype(cdt)

    # Head mixing, step 2: Mt = M^T = sum_h (Qf_h @ G @ Pf_h^T / N)^T.
    # Per-head 128-wide matmuls on lane-aligned slices; H is small and this
    # cannot be a single plain matmul (both of G's indices are contracted).
    Mt = jnp.zeros((bb, d_pad, d_pad), jnp.float32)
    for h in range(H):
        qf = qcat_ref[0, h * d_pad:(h + 1) * d_pad, :]   # Qf_h, (d_pad, d_pad)
        gp = GPc[:, :, h * d_pad:(h + 1) * d_pad]        # (bb, d_pad, d_pad)
        Mt = Mt + jnp.einsum('bjl,ij->bli', gp, qf,
                             preferred_element_type=jnp.float32)

    # Layer update (1/N already folded into P): Z <- Z + Z @ M.
    acc_ref[...] += jnp.einsum('bni,bli->bnl', Zc, Mt.astype(cdt),
                               preferred_element_type=jnp.float32)

    @pl.when(layer == n_layers - 1)
    def _():
        out_ref[...] = acc_ref[...].astype(out_ref.dtype)


def meta_transformer_forward(Z, P_full, Q_full, *, batch_block=None, mxu_dtype=None):
    """Z: (B, N+1, d+1); P_full/Q_full: (L, H, d+1, d+1).

    mxu_dtype: optional override of the MXU feed dtype (e.g. jnp.bfloat16 for
    f32 callers that accept bf16 matmul numerics; accumulation stays f32).
    """
    B, N1, d1 = Z.shape
    L, H = P_full.shape[:2]
    N = N1 - 1

    cdt = jnp.dtype(mxu_dtype) if mxu_dtype is not None else jnp.dtype(Z.dtype)
    z_isz = jnp.dtype(Z.dtype).itemsize
    c_isz = cdt.itemsize

    # Pad tokens to the dtype-native sublane tile, features to full lanes.
    sub = 32 // max(1, min(z_isz, c_isz, 4))   # 8 for f32, 16 for bf16, 32 for int8
    n_pad = _round_up(N1, sub)
    d_pad = _round_up(d1, 128)

    # ---- VMEM-derived batch block + limit (v5e/v6e: 128 MiB, v7x: 64 MiB) ----
    cap = _vmem_capacity_bytes()
    budget = (cap * 11) // 20                       # ~55% for our working set
    pq_blk = H * d_pad * d_pad * c_isz              # one P or Q layer slab
    per_bb = (n_pad * d_pad * (4 * z_isz + 4)       # Z in/out (dbl-buffered) + f32 acc
              + n_pad * d_pad * (4 + c_isz)         # upd (f32) + Zc
              + d_pad * d_pad * 3 * 4               # G, rank-1 outer, Mt (f32)
              + H * d_pad * d_pad * (4 + c_isz))    # GPall (f32) + cdt copy
    if batch_block is None:
        bb = max(1, min(B, (budget - 4 * pq_blk) // max(per_bb, 1)))
    else:
        bb = max(1, min(batch_block, B))
    nb = -(-B // bb)
    bb = -(-B // nb)            # even out blocks to minimize batch padding
    b_pad = nb * bb

    need = 4 * pq_blk + per_bb * bb
    vmem_limit = int(min(cap * 3 // 4, max(need + (8 << 20), 32 << 20)))
    vmem_limit = max(vmem_limit, min(need, cap * 3 // 4))

    # ---- Padding / head stacking (all exact: padded rows/cols stay zero) ----
    Zp = jnp.zeros((b_pad, n_pad, d_pad), Z.dtype).at[:B, :N1, :d1].set(Z)

    # P pre-scaled by 1/N (folds the attention's /N for free).  Heads stacked
    # vertically -> (L, H*d_pad, d_pad) so the G@P^T head mix is one wide matmul.
    Pp = jnp.zeros((L, H, d_pad, d_pad), jnp.float32)
    Pp = Pp.at[:, :, :d1, :d1].set(P_full.astype(jnp.float32) / float(N))
    Pp = Pp.reshape(L, H * d_pad, d_pad).astype(cdt)

    Qp = jnp.zeros((L, H, d_pad, d_pad), jnp.float32)
    Qp = Qp.at[:, :, :d1, :d1].set(Q_full.astype(jnp.float32))
    Qp = Qp.reshape(L, H * d_pad, d_pad).astype(cdt)

    kernel = functools.partial(_meta_transformer_kernel, H=H, N=N)

    out = pl.pallas_call(
        kernel,
        out_shape=jax.ShapeDtypeStruct((b_pad, n_pad, d_pad), Z.dtype),
        grid=(nb, L),   # layer axis LAST ("arbitrary"): resident accumulator invariant
        in_specs=[
            pl.BlockSpec((bb, n_pad, d_pad), lambda b, l: (b, 0, 0)),        # Z block
            pl.BlockSpec((1, H * d_pad, d_pad), lambda b, l: (l, 0, 0)),     # P_cat layer l
            pl.BlockSpec((1, H * d_pad, d_pad), lambda b, l: (l, 0, 0)),     # Q_cat layer l
        ],
        out_specs=pl.BlockSpec((bb, n_pad, d_pad), lambda b, l: (b, 0, 0)),
        scratch_shapes=[pltpu.VMEM((bb, n_pad, d_pad), jnp.float32)],
        compiler_params=pltpu.CompilerParams(
            dimension_semantics=("parallel", "arbitrary"),
            vmem_limit_bytes=vmem_limit,
        ),
    )(Zp, Pp, Qp)

    return out[:B, :N1, :d1]


def build_full_params(allparam):
    """allparam: (L, H, 2, d, d) -> (P_full, Q_full) each (L, H, d+1, d+1)."""
    L, H, _, d, _ = allparam.shape
    P = allparam[:, :, 0]
    Q = allparam[:, :, 1]
    P_full = jnp.zeros((L, H, d + 1, d + 1), jnp.float32)
    P_full = P_full.at[:, :, :d, :d].set(P).at[:, :, d, d].set(1.0)
    Q_full = jnp.zeros((L, H, d + 1, d + 1), jnp.float32)
    Q_full = Q_full.at[:, :, :d, :d].set(Q)
    return P_full, Q_full


def reference_forward(Z, P_full, Q_full):
    """Pure-JAX transcription of the PyTorch forward (correctness check)."""
    B, N1, d1 = Z.shape
    N = N1 - 1
    L, H = P_full.shape[:2]
    A = jnp.eye(N1, dtype=jnp.float32).at[N, N].set(0.0)
    for i in range(L):
        res = jnp.zeros_like(Z)
        for j in range(H):
            Pf, Qf = P_full[i, j], Q_full[i, j]
            sim = jnp.einsum('BNi,ij,BMj->BNM', Z, Qf, Z)
            val = jnp.einsum('ij,BNj->BNi', Pf, Z)
            res = res + jnp.einsum('BNM,ML,BLi->BNi', sim, A, val) / N
        Z = Z + res
    return Z


if __name__ == "__main__":
    # Small shapes consistent with the module: L layers, H heads, d features,
    # N context tokens (+1 query token appended), batch B.
    L, H, d, N, B = 2, 2, 16, 8, 2
    std = 0.02

    key = jax.random.PRNGKey(0)
    k_param, k_z = jax.random.split(key)

    # nn.init.normal_(allparam, 0.0, std)
    allparam = std * jax.random.normal(k_param, (L, H, 2, d, d), dtype=jnp.float32)
    P_full, Q_full = build_full_params(allparam)

    # Tokens Z: (B, N+1, d+1) = features ‖ label, last token is the query.
    Z = jax.random.normal(k_z, (B, N + 1, d + 1), dtype=jnp.float32)

    # f32 path: must match the pure-JAX reference tightly.
    out = jax.block_until_ready(meta_transformer_forward(Z, P_full, Q_full))
    ref = reference_forward(Z, P_full, Q_full)
    assert out.shape == Z.shape
    assert jnp.allclose(out, ref, atol=1e-4, rtol=1e-4), "f32 mismatch vs reference"

    # bf16 path (bf16 MXU feed, f32 accumulation): loose-tolerance sanity check.
    out_bf = jax.block_until_ready(
        meta_transformer_forward(Z.astype(jnp.bfloat16), P_full, Q_full))
    assert out_bf.dtype == jnp.bfloat16
    assert jnp.allclose(out_bf.astype(jnp.float32), ref, atol=5e-2, rtol=5e-2), \
        "bf16 mismatch vs reference"

    print("KERNEL_OK")
</pallas_src>

<mosaic_0001>
module attributes {stable_mosaic.version = 11 : i64} {
  func.func @_meta_transformer_kernel(%arg0: i32, %arg1: i32, %arg2: memref<2x16x128xf32, #tpu.memory_space<vmem>>, %arg3: memref<1x256x128xf32, #tpu.memory_space<vmem>>, %arg4: memref<1x256x128xf32, #tpu.memory_space<vmem>>, %arg5: memref<2x16x128xf32, #tpu.memory_space<vmem>>, %arg6: memref<2x16x128xf32, #tpu.memory_space<vmem>>) attributes {dimension_semantics = [#tpu.dimension_semantics<parallel>, #tpu.dimension_semantics<arbitrary>], iteration_bounds = array<i64: 1, 2>, scalar_prefetch = 0 : i64, scratch_operands = 1 : i64, tpu.core_type = #tpu.core_type<tc>, window_params = [{transform_indices = @transform_0, window_bounds = array<i64: 2, 16, 128>}, {transform_indices = @transform_1, window_bounds = array<i64: 1, 256, 128>}, {transform_indices = @transform_2, window_bounds = array<i64: 1, 256, 128>}, {transform_indices = @transform_3, window_bounds = array<i64: 2, 16, 128>}]} {
    %c0_i32 = arith.constant 0 : i32
    %0 = arith.cmpi eq, %arg1, %c0_i32 : i32
    %1 = arith.extui %0 : i1 to i32
    %c0_i32_0 = arith.constant 0 : i32
    %2 = arith.cmpi ne, %1, %c0_i32_0 : i32
    scf.if %2 {
      %c0_23 = arith.constant 0 : index
      %c0_24 = arith.constant 0 : index
      %c0_25 = arith.constant 0 : index
      %34 = vector.load %arg2[%c0_23, %c0_24, %c0_25] : memref<2x16x128xf32, #tpu.memory_space<vmem>>, vector<2x16x128xf32>
      %c0_26 = arith.constant 0 : index
      %c0_27 = arith.constant 0 : index
      %c0_28 = arith.constant 0 : index
      %35 = vector.load %arg6[%c0_26, %c0_27, %c0_28] : memref<2x16x128xf32, #tpu.memory_space<vmem>>, vector<2x16x128xf32>
      tpu.vector_store %arg6[%c0_26, %c0_27, %c0_28], %34 {strides = array<i32>} : memref<2x16x128xf32, #tpu.memory_space<vmem>>, vector<2x16x128xf32>,
    } else {
    }
    %c0 = arith.constant 0 : index
    %c0_1 = arith.constant 0 : index
    %c0_2 = arith.constant 0 : index
    %3 = vector.load %arg6[%c0, %c0_1, %c0_2] : memref<2x16x128xf32, #tpu.memory_space<vmem>>, vector<2x16x128xf32>
    "tpu.trace_start"() <{level = 10 : i32, message = "bni,bnk->bik"}> : () -> ()
    %cst = arith.constant dense<0.000000e+00> : vector<2x128x128xf32>
    %4 = tpu.matmul %3, %3, %cst {dimension_numbers = #tpu.dot_dimension_numbers<[1], [1], [2], [2], [0, 0, 0, 2, 1, 2], [0], [0]>} : vector<2x16x128xf32>, vector<2x16x128xf32>, vector<2x128x128xf32> -> vector<2x128x128xf32>
    "tpu.trace_stop"() : () -> ()
    %5 = vector.extract_strided_slice %3 {offsets = [0, 8, 0], sizes = [2, 1, 128], strides = [1, 1, 1]} : vector<2x16x128xf32> to vector<2x1x128xf32>
    %6 = vector.shape_cast %5 : vector<2x1x128xf32> to vector<2x128xf32>
    %7 = vector.shape_cast %6 : vector<2x128xf32> to vector<2x128x1xf32>
    %8 = vector.shape_cast %6 : vector<2x128xf32> to vector<2x1x128xf32>
    %9 = vector.broadcast %7 : vector<2x128x1xf32> to vector<2x128x128xf32>
    %10 = vector.broadcast %8 : vector<2x1x128xf32> to vector<2x128x128xf32>
    %11 = arith.mulf %9, %10 : vector<2x128x128xf32>
    %12 = arith.subf %4, %11 : vector<2x128x128xf32>
    %c0_3 = arith.constant 0 : index
    %c0_4 = arith.constant 0 : index
    %c0_5 = arith.constant 0 : index
    %13 = vector.load %arg3[%c0_3, %c0_4, %c0_5] : memref<1x256x128xf32, #tpu.memory_space<vmem>>, vector<1x256x128xf32>
    %14 = vector.shape_cast %13 : vector<1x256x128xf32> to vector<256x128xf32>
    "tpu.trace_start"() <{level = 10 : i32, message = "bjk,ak->bja"}> : () -> ()
    %cst_6 = arith.constant dense<0.000000e+00> : vector<2x128x256xf32>
    %15 = tpu.matmul %12, %14, %cst_6 {dimension_numbers = #tpu.dot_dimension_numbers<[2], [1], [0, 1], [0], [0, 0, 0, 1, 1, 0], [], []>} : vector<2x128x128xf32>, vector<256x128xf32>, vector<2x128x256xf32> -> vector<2x128x256xf32>
    %cst_7 = arith.constant 0.000000e+00 : f32
    "tpu.trace_stop"() : () -> ()
    %16 = vector.broadcast %cst_7 : f32 to vector<2x128x128xf32>
    %c0_8 = arith.constant 0 : index
    %c0_9 = arith.constant 0 : index
    %c0_10 = arith.constant 0 : index
    %17 = vector.load %arg4[%c0_8, %c0_9, %c0_10] : memref<1x256x128xf32, #tpu.memory_space<vmem>>, vector<1x128x128xf32>
    %18 = vector.shape_cast %17 : vector<1x128x128xf32> to vector<128x128xf32>
    %19 = vector.extract_strided_slice %15 {offsets = [0, 0, 0], sizes = [2, 128, 128], strides = [1, 1, 1]} : vector<2x128x256xf32> to vector<2x128x128xf32>
    "tpu.trace_start"() <{level = 10 : i32, message = "bjl,ij->bli"}> : () -> ()
    %cst_11 = arith.constant dense<0.000000e+00> : vector<2x128x128xf32>
    %20 = tpu.matmul %19, %18, %cst_11 {dimension_numbers = #tpu.dot_dimension_numbers<[1], [1], [0, 2], [0], [0, 0, 0, 2, 1, 0], [], []>} : vector<2x128x128xf32>, vector<128x128xf32>, vector<2x128x128xf32> -> vector<2x128x128xf32>
    "tpu.trace_stop"() : () -> ()
    %21 = arith.addf %16, %20 : vector<2x128x128xf32>
    %c0_12 = arith.constant 0 : index
    %c128 = arith.constant 128 : index
    %c0_13 = arith.constant 0 : index
    %22 = vector.load %arg4[%c0_12, %c128, %c0_13] : memref<1x256x128xf32, #tpu.memory_space<vmem>>, vector<1x128x128xf32>
    %23 = vector.shape_cast %22 : vector<1x128x128xf32> to vector<128x128xf32>
    %24 = vector.extract_strided_slice %15 {offsets = [0, 0, 128], sizes = [2, 128, 128], strides = [1, 1, 1]} : vector<2x128x256xf32> to vector<2x128x128xf32>
    "tpu.trace_start"() <{level = 10 : i32, message = "bjl,ij->bli"}> : () -> ()
    %cst_14 = arith.constant dense<0.000000e+00> : vector<2x128x128xf32>
    %25 = tpu.matmul %24, %23, %cst_14 {dimension_numbers = #tpu.dot_dimension_numbers<[1], [1], [0, 2], [0], [0, 0, 0, 2, 1, 0], [], []>} : vector<2x128x128xf32>, vector<128x128xf32>, vector<2x128x128xf32> -> vector<2x128x128xf32>
    "tpu.trace_stop"() : () -> ()
    %26 = arith.addf %21, %25 : vector<2x128x128xf32>
    %c0_15 = arith.constant 0 : index
    %c0_16 = arith.constant 0 : index
    %c0_17 = arith.constant 0 : index
    %27 = vector.load %arg6[%c0_15, %c0_16, %c0_17] : memref<2x16x128xf32, #tpu.memory_space<vmem>>, vector<2x16x128xf32>
    "tpu.trace_start"() <{level = 10 : i32, message = "bni,bli->bnl"}> : () -> ()
    %cst_18 = arith.constant dense<0.000000e+00> : vector<2x16x128xf32>
    %28 = tpu.matmul %3, %26, %cst_18 {dimension_numbers = #tpu.dot_dimension_numbers<[2], [2], [1], [1], [0, 0, 0, 1, 1, 1], [0], [0]>} : vector<2x16x128xf32>, vector<2x128x128xf32>, vector<2x16x128xf32> -> vector<2x16x128xf32>
    "tpu.trace_stop"() : () -> ()
    %29 = arith.addf %27, %28 : vector<2x16x128xf32>
    %c0_19 = arith.constant 0 : index
    %c0_20 = arith.constant 0 : index
    %c0_21 = arith.constant 0 : index
    %30 = vector.load %arg6[%c0_19, %c0_20, %c0_21] : memref<2x16x128xf32, #tpu.memory_space<vmem>>, vector<2x16x128xf32>
    tpu.vector_store %arg6[%c0_19, %c0_20, %c0_21], %29 {strides = array<i32>} : memref<2x16x128xf32, #tpu.memory_space<vmem>>, vector<2x16x128xf32>,
    %c1_i32 = arith.constant 1 : i32
    %31 = arith.cmpi eq, %arg1, %c1_i32 : i32
    %32 = arith.extui %31 : i1 to i32
    %c0_i32_22 = arith.constant 0 : i32
    %33 = arith.cmpi ne, %32, %c0_i32_22 : i32
    scf.if %33 {
      %c0_23 = arith.constant 0 : index
      %c0_24 = arith.constant 0 : index
      %c0_25 = arith.constant 0 : index
      %34 = vector.load %arg6[%c0_23, %c0_24, %c0_25] : memref<2x16x128xf32, #tpu.memory_space<vmem>>, vector<2x16x128xf32>
      %c0_26 = arith.constant 0 : index
      %c0_27 = arith.constant 0 : index
      %c0_28 = arith.constant 0 : index
      %35 = vector.load %arg5[%c0_26, %c0_27, %c0_28] : memref<2x16x128xf32, #tpu.memory_space<vmem>>, vector<2x16x128xf32>
      tpu.vector_store %arg5[%c0_26, %c0_27, %c0_28], %34 {strides = array<i32>} : memref<2x16x128xf32, #tpu.memory_space<vmem>>, vector<2x16x128xf32>,
    } else {
    }
    return
  }
  func.func @transform_0(%arg0: i32, %arg1: i32) -> (i32, i32, i32) {
    %c0_i32 = arith.constant 0 : i32
    %c0_i32_0 = arith.constant 0 : i32
    %c0_i32_1 = arith.constant 0 : i32
    return %arg0, %c0_i32, %c0_i32_0 : i32, i32, i32
  }
  func.func @transform_1(%arg0: i32, %arg1: i32) -> (i32, i32, i32) {
    %c0_i32 = arith.constant 0 : i32
    %c0_i32_0 = arith.constant 0 : i32
    %c0_i32_1 = arith.constant 0 : i32
    return %arg1, %c0_i32, %c0_i32_0 : i32, i32, i32
  }
  func.func @transform_2(%arg0: i32, %arg1: i32) -> (i32, i32, i32) {
    %c0_i32 = arith.constant 0 : i32
    %c0_i32_0 = arith.constant 0 : i32
    %c0_i32_1 = arith.constant 0 : i32
    return %arg1, %c0_i32, %c0_i32_0 : i32, i32, i32
  }
  func.func @transform_3(%arg0: i32, %arg1: i32) -> (i32, i32, i32) {
    %c0_i32 = arith.constant 0 : i32
    %c0_i32_0 = arith.constant 0 : i32
    %c0_i32_1 = arith.constant 0 : i32
    return %arg0, %c0_i32, %c0_i32_0 : i32, i32, i32
  }
}

</mosaic_0001>

<llo_original>
// kernel: tpu_custom_call.1
$region0: #{tpu_custom_call.1}
  #allocation0 [shape = 'u32[]', space=smem, size = 0x4, offset = 0x4, fixed_abs, tag = 'smem constant byte address 0x4 - core index']
  #allocation1 [shape = 'u32[144,128]{1,0:T(1,128)}', space=vmem, size = 0x12000, scoped, tag = 'internal scratch']
  #allocation2 [shape = 'f32[2,16,128]{2,1,0:T(8,128)}', space=vmem, size = 0x4000, scoped, tag = 'scratch operand']
  %s0 = inlined_call_operand.hbm [shape: f32[2,16,128], index: 0, kind: input, shape index: {}]
  %s1 = inlined_call_operand.hbm [shape: f32[2,256,128], index: 1, kind: input, shape index: {}]
  %s2 = inlined_call_operand.hbm [shape: f32[2,256,128], index: 2, kind: input, shape index: {}]
  %s3 = inlined_call_operand.hbm [shape: f32[2,16,128], index: 3, kind: output, shape index: {}]
  %s4 = sld [smem:[#allocation0]]
  $region65: #{tpu_custom_call.1} parent=0
    _
  %s6 = ssub.s32 1, %s4
  %s7 = scalar_select 0, %s6, %s4
  $region1: #{tpu_custom_call.1} parent=0
    #allocation3 [shape = 'u8[16384]{0}', space=vmem, size = 0x4000, scoped, tag = 'input window, operand 0, single buffered']
    #allocation4 [shape = 's32[2]{0}', space=sflag, size = 0x8, scoped, tag = 'scoped memory for tpu_custom_call.1']
    #allocation5 [shape = 's32[2]{0}', space=sflag, size = 0x8, scoped, tag = 'scoped memory for tpu_custom_call.1']
    #allocation6 [shape = 'u8[262144]{0}', space=vmem, size = 0x40000, scoped, tag = 'input window, operand 1']
    #allocation7 [shape = 's32[2]{0}', space=sflag, size = 0x8, scoped, tag = 'scoped memory for tpu_custom_call.1']
    #allocation8 [shape = 'u8[262144]{0}', space=vmem, size = 0x40000, scoped, tag = 'input window, operand 2']
    #allocation9 [shape = 'u8[16384]{0}', space=vmem, size = 0x4000, scoped, tag = 'output window, operand 0, single buffered']
    %8 = vsyncpa [#allocation4], 0
    %9 = vsyncpa [#allocation7], 0
    %s10 = scalar_lea.sflag [#allocation7], 1
    %11 = vsyncpa %s10, 0
    %12 = vsyncpa [#allocation5], 0
    loop: start=0, step=1, limit=4
    $region2: #{tpu_custom_call.1} parent=1 // loop_pre_header
      _
    $region3: #{tpu_custom_call.1} parent=1 // loop_header
      %s14 = sphi 0, %s18
      %p15 = scmp.ge.s32.totalorder %s14, 4
      %s21 = sphi 0, %s33
      %s22 = sphi 0, %s29
      %s23 = sphi 0, %s21
      %s24 = sphi 0, %s22
      %s25 = sphi 0, %s23
      %s26 = sphi 0, %s24
      %s36 = sphi 0, %s38
      %s39 = sphi 0, %s36
      %s40 = sphi 0, %s39
      %s56 = sphi 0, %s40
      %s62 = sphi 0, %s64
      %s65 = sphi 0, %s62
      %s66 = sphi 0, %s65
      %s82 = sphi 0, %s66
      %s88 = sphi 0, %s90
      %s91 = sphi 0, %s88
      %s92 = sphi 0, %s91
      %s108 = sphi 0, %s92
      %s114 = sphi 0, %s116
      %s117 = sphi 0, %s114
      %s118 = sphi 0, %s117
      %s134 = sphi 0, %s118
    $region4: #{tpu_custom_call.1} parent=1 // loop_header_branch
      %17 = sbr.rel (%p15) target = $region8
    $region5: #{tpu_custom_call.1} parent=1 // loop_body
      %s19 = ssub.s32 %s14, 1
      %s20 = ssub.s32 %s14, 2
      %s27 = sadd.s32 1, %s22
      %p28 = scmp.ge.s32.totalorder %s27, 2
      %s29 = scalar_select %p28, 0, %s27
      %s30 = sadd.s32 1, %s21
      %s31 = scalar_select %p28, %s30, %s21
      %p32 = scmp.ge.s32.totalorder %s31, 1
      %s33 = scalar_select %p32, 0, %s31
      %s34 = ssub.s32 %s21, %s33
      %p35 = scmp.eq.s32.totalorder %s34, 0
      %s37 = sadd.s32 %s36, 1
      %s38 = scalar_select %p35, %s36, %s37
      %p41 = pneg %p35
      %p42 = scmp.eq.s32.totalorder %s14, 1
      %p43 = por %p41, %p42
      %p44 = scmp.ne.s32.totalorder %s36, %s39
      %p45 = scmp.eq.s32.totalorder %s14, 0
      %p46 = por %p44, %p45
      %p47 = scmp.ne.s32.totalorder %s36, %s39
      %p48 = scmp.eq.s32.totalorder %s19, 1
      %p49 = por %p47, %p48
      %p50 = scmp.ne.s32.totalorder %s39, %s40
      %p51 = scmp.eq.s32.totalorder %s19, 0
      %p52 = por %p50, %p51
      %p53 = scmp.ne.s32.totalorder %s39, %s40
      %p54 = scmp.eq.s32.totalorder %s20, 1
      %p55 = por %p53, %p54
      %p57 = scmp.ne.s32.totalorder %s40, %s56
      %p58 = scmp.eq.s32.totalorder %s20, 0
      %p59 = por %p57, %p58
      %s60 = ssub.s32 %s22, %s29
      %p61 = scmp.eq.s32.totalorder %s60, 0
      %s63 = sadd.s32 %s62, 1
      %s64 = scalar_select %p61, %s62, %s63
      %p67 = pneg %p61
      %p68 = scmp.eq.s32.totalorder %s14, 1
      %p69 = por %p67, %p68
      %p70 = scmp.ne.s32.totalorder %s62, %s65
      %p71 = scmp.eq.s32.totalorder %s14, 0
      %p72 = por %p70, %p71
      %p73 = scmp.ne.s32.totalorder %s62, %s65
      %p74 = scmp.eq.s32.totalorder %s19, 1
      %p75 = por %p73, %p74
      %p76 = scmp.ne.s32.totalorder %s65, %s66
      %p77 = scmp.eq.s32.totalorder %s19, 0
      %p78 = por %p76, %p77
      %p79 = scmp.ne.s32.totalorder %s65, %s66
      %p80 = scmp.eq.s32.totalorder %s20, 1
      %p81 = por %p79, %p80
      %p83 = scmp.ne.s32.totalorder %s66, %s82
      %p84 = scmp.eq.s32.totalorder %s20, 0
      %p85 = por %p83, %p84
      %s86 = ssub.s32 %s22, %s29
      %p87 = scmp.eq.s32.totalorder %s86, 0
      %s89 = sadd.s32 %s88, 1
      %s90 = scalar_select %p87, %s88, %s89
      %p93 = pneg %p87
      %p94 = scmp.eq.s32.totalorder %s14, 1
      %p95 = por %p93, %p94
      %p96 = scmp.ne.s32.totalorder %s88, %s91
      %p97 = scmp.eq.s32.totalorder %s14, 0
      %p98 = por %p96, %p97
      %p99 = scmp.ne.s32.totalorder %s88, %s91
      %p100 = scmp.eq.s32.totalorder %s19, 1
      %p101 = por %p99, %p100
      %p102 = scmp.ne.s32.totalorder %s91, %s92
      %p103 = scmp.eq.s32.totalorder %s19, 0
      %p104 = por %p102, %p103
      %p105 = scmp.ne.s32.totalorder %s91, %s92
      %p106 = scmp.eq.s32.totalorder %s20, 1
      %p107 = por %p105, %p106
      %p109 = scmp.ne.s32.totalorder %s92, %s108
      %p110 = scmp.eq.s32.totalorder %s20, 0
      %p111 = por %p109, %p110
      %s112 = ssub.s32 %s21, %s33
      %p113 = scmp.eq.s32.totalorder %s112, 0
      %s115 = sadd.s32 %s114, 1
      %s116 = scalar_select %p113, %s114, %s115
      %p119 = pneg %p113
      %p120 = scmp.eq.s32.totalorder %s14, 1
      %p121 = por %p119, %p120
      %p122 = scmp.ne.s32.totalorder %s114, %s117
      %p123 = scmp.eq.s32.totalorder %s14, 0
      %p124 = por %p122, %p123
      %p125 = scmp.ne.s32.totalorder %s114, %s117
      %p126 = scmp.eq.s32.totalorder %s19, 1
      %p127 = por %p125, %p126
      %p128 = scmp.ne.s32.totalorder %s117, %s118
      %p129 = scmp.eq.s32.totalorder %s19, 0
      %p130 = por %p128, %p129
      %p131 = scmp.ne.s32.totalorder %s117, %s118
      %p132 = scmp.eq.s32.totalorder %s20, 1
      %p133 = por %p131, %p132
      %p135 = scmp.ne.s32.totalorder %s118, %s134
      %p136 = scmp.eq.s32.totalorder %s20, 0
      %p137 = por %p135, %p136
      %p138 = scmp.le.s32.totalorder 1, %s14
      %p139 = scmp.lt.s32.totalorder %s14, 3
      %p140 = pnand %p138, %p139
      %p141 = pneg %p140
      // Predicated region
      $region9: #{tpu_custom_call.1} parent=5 // pred_check
        _
      $region10: #{tpu_custom_call.1} parent=5 // pred_check_branch
        %143 = sbr.rel (%p140) target = $region12
      $region11: #{tpu_custom_call.1} parent=5 // pred_region
        %s144 = ssub.s32 %s14, 1
        // Predicated region
        $region13: #{tpu_custom_call.1} parent=11 // pred_check
          %p145 = pneg %p52
        $region14: #{tpu_custom_call.1} parent=11 // pred_check_branch
          %147 = sbr.rel (%p145) target = $region16
        $region15: #{tpu_custom_call.1} parent=11 // pred_region
          %s148 = smul.u32 2, %s23
          %s150 = ssub.s32 512, 512
          %151 = vsyncadd [#allocation4], %s150
          %s152 = smul.addr %s148, 2
          %s153 = smul.addr %s152, 128
          %s154 = scalar_lea.hbm %s0, %s153
          %s155 = sshll.u32 [#allocation3], 4
          %s156 = int_to_ptr.vmem [resolvable:$true] %s155
          %161 = dma.hbm_to_vmem [thread:$0]  %s154, 512, %s156, [#allocation4], 128, 128, 8
        $region16: #{tpu_custom_call.1} parent=11 // pred_fallthru
          _
      $region12: #{tpu_custom_call.1} parent=5 // pred_fallthru
        _
      %p162 = scmp.lt.s32.totalorder %s14, 2
      // Predicated region
      $region17: #{tpu_custom_call.1} parent=5 // pred_check
        %p163 = pneg %p162
      $region18: #{tpu_custom_call.1} parent=5 // pred_check_branch
        %165 = sbr.rel (%p163) target = $region20
      $region19: #{tpu_custom_call.1} parent=5 // pred_region
        // Predicated region
        $region21: #{tpu_custom_call.1} parent=19 // pred_check
          %p166 = pneg %p72
        $region22: #{tpu_custom_call.1} parent=19 // pred_check_branch
          %168 = sbr.rel (%p166) target = $region24
        $region23: #{tpu_custom_call.1} parent=19 // pred_region
          %s169 = sand.u32 %s14, 1
          %s170 = scalar_lea.sflag [#allocation7], %s169
          %s171 = sand.u32 %s62, 1
          %s172 = smul.addr %s171, 256
          %s173 = scalar_lea.vmem [#allocation6], %s172
          %s175 = ssub.s32 4096, 4096
          %176 = vsyncadd %s170, %s175
          %s177 = smul.addr %s22, 32
          %s178 = smul.addr %s177, 128
          %s179 = scalar_lea.hbm %s1, %s178
          %s180 = sshll.u32 %s173, 4
          %s181 = int_to_ptr.vmem [resolvable:$true] %s180
          %186 = dma.hbm_to_vmem [thread:$0]  %s179, 4096, %s181, %s170, 128, 128, 8
        $region24: #{tpu_custom_call.1} parent=19 // pred_fallthru
          _
        // Predicated region
        $region25: #{tpu_custom_call.1} parent=19 // pred_check
          %p187 = pneg %p98
        $region26: #{tpu_custom_call.1} parent=19 // pred_check_branch
          %189 = sbr.rel (%p187) target = $region28
        $region27: #{tpu_custom_call.1} parent=19 // pred_region
          %s190 = sand.u32 %s14, 1
          %s191 = scalar_lea.sflag [#allocation7], %s190
          %s192 = sand.u32 %s88, 1
          %s193 = smul.addr %s192, 256
          %s194 = scalar_lea.vmem [#allocation8], %s193
          %s196 = ssub.s32 4096, 4096
          %197 = vsyncadd %s191, %s196
          %s198 = smul.addr %s22, 32
          %s199 = smul.addr %s198, 128
          %s200 = scalar_lea.hbm %s2, %s199
          %s201 = sshll.u32 %s194, 4
          %s202 = int_to_ptr.vmem [resolvable:$true] %s201
          %207 = dma.hbm_to_vmem [thread:$0]  %s200, 4096, %s202, %s191, 128, 128, 8
        $region28: #{tpu_custom_call.1} parent=19 // pred_fallthru
          _
      $region20: #{tpu_custom_call.1} parent=5 // pred_fallthru
        _
      %p208 = scmp.le.s32.totalorder 1, %s14
      %p209 = scmp.lt.s32.totalorder %s14, 3
      %p210 = pnand %p208, %p209
      %p211 = pneg %p210
      // Predicated region
      $region29: #{tpu_custom_call.1} parent=5 // pred_check
        _
      $region30: #{tpu_custom_call.1} parent=5 // pred_check_branch
        %213 = sbr.rel (%p210) target = $region32
      $region31: #{tpu_custom_call.1} parent=5 // pred_region
        %s214 = ssub.s32 %s14, 1
        // Predicated region
        $region33: #{tpu_custom_call.1} parent=31 // pred_check
          %p215 = pneg %p52
        $region34: #{tpu_custom_call.1} parent=31 // pred_check_branch
          %217 = sbr.rel (%p215) target = $region36
        $region35: #{tpu_custom_call.1} parent=31 // pred_region
          %218 = dma.done [#allocation4], 512
        $region36: #{tpu_custom_call.1} parent=31 // pred_fallthru
          _
        %s219 = sand.u32 %s19, 1
        %s220 = scalar_lea.sflag [#allocation7], %s219
        %s221 = sand.u32 %s65, 1
        %s222 = smul.addr %s221, 256
        %s223 = scalar_lea.vmem [#allocation6], %s222
        // Predicated region
        $region37: #{tpu_custom_call.1} parent=31 // pred_check
          %p224 = pneg %p78
        $region38: #{tpu_custom_call.1} parent=31 // pred_check_branch
          %226 = sbr.rel (%p224) target = $region40
        $region39: #{tpu_custom_call.1} parent=31 // pred_region
          %227 = dma.done %s220, 4096
        $region40: #{tpu_custom_call.1} parent=31 // pred_fallthru
          _
        %s228 = sand.u32 %s19, 1
        %s229 = scalar_lea.sflag [#allocation7], %s228
        %s230 = sand.u32 %s91, 1
        %s231 = smul.addr %s230, 256
        %s232 = scalar_lea.vmem [#allocation8], %s231
        // Predicated region
        $region41: #{tpu_custom_call.1} parent=31 // pred_check
          %p233 = pneg %p104
        $region42: #{tpu_custom_call.1} parent=31 // pred_check_branch
          %235 = sbr.rel (%p233) target = $region44
        $region43: #{tpu_custom_call.1} parent=31 // pred_region
          %236 = dma.done %s229, 4096
        $region44: #{tpu_custom_call.1} parent=31 // pred_fallthru
          _
        %p237 = pneg %p52
        %p238 = pneg %p49
        %s239 = sand.u32 %s19, 1
        %s240 = scalar_lea.sflag [#allocation7], %s239
        %s241 = sand.u32 %s65, 1
        %s242 = smul.addr %s241, 256
        %s243 = scalar_lea.vmem [#allocation6], %s242
        %p244 = pneg %p78
        %p245 = pneg %p75
        %s246 = sand.u32 %s19, 1
        %s247 = scalar_lea.sflag [#allocation7], %s246
        %s248 = sand.u32 %s91, 1
        %s249 = smul.addr %s248, 256
        %s250 = scalar_lea.vmem [#allocation8], %s249
        %p251 = pneg %p104
        %p252 = pneg %p101
        %p253 = pneg %p130
        %p254 = pneg %p127
        %s255 = smul.u32 2, %s23
        %s256 = smul.u32 2, %s23
        %p257 = scmp.eq.s32.totalorder %s24, 0
        // Predicated region
        $region45: #{tpu_custom_call.1} parent=31 // pred_check
          %p258 = pneg %p257
        $region46: #{tpu_custom_call.1} parent=31 // pred_check_branch
          %260 = sbr.rel (%p258) target = $region48
        $region47: #{tpu_custom_call.1} parent=31 // pred_region
          %v261 = vld [vmem:[#allocation3] sm:$0xff]
          %v262 = vld [vmem:[#allocation3 + $0x8] sm:$0xff]
          %v263 = vld [vmem:[#allocation3 + $0x10] sm:$0xff]
          %v264 = vld [vmem:[#allocation3 + $0x18] sm:$0xff]
          %265 = vst [vmem:[#allocation2] sm:$0xff] %v261
          %266 = vst [vmem:[#allocation2 + $0x8] sm:$0xff] %v262
          %267 = vst [vmem:[#allocation2 + $0x10] sm:$0xff] %v263
          %268 = vst [vmem:[#allocation2 + $0x18] sm:$0xff] %v264
        $region48: #{tpu_custom_call.1} parent=31 // pred_fallthru
          _
        %v269 = vld [vmem:[#allocation2] sm:$0xff]
        %v270 = vld [vmem:[#allocation2 + $0x8] sm:$0xff]
        %v271 = vld [vmem:[#allocation2 + $0x10] sm:$0xff]
        %v272 = vld [vmem:[#allocation2 + $0x18] sm:$0xff]
        %273 = vxpose.xlu0.b32.start [1/16] %v269, 128
        %274 = vxpose.xlu0.b32.cont [2/16] %v270, 128
        %275 = vxpose.xlu0.b32.cont [3/16] 0.0, 128
        %276 = vxpose.xlu0.b32.cont [4/16] 0.0, 128
        %277 = vxpose.xlu0.b32.cont [5/16] 0.0, 128
        %278 = vxpose.xlu0.b32.cont [6/16] 0.0, 128
        %279 = vxpose.xlu0.b32.cont [7/16] 0.0, 128
        %280 = vxpose.xlu0.b32.cont [8/16] 0.0, 128
        %281 = vxpose.xlu0.b32.cont [9/16] 0.0, 128
        %282 = vxpose.xlu0.b32.cont [10/16] 0.0, 128
        %283 = vxpose.xlu0.b32.cont [11/16] 0.0, 128
        %284 = vxpose.xlu0.b32.cont [12/16] 0.0, 128
        %285 = vxpose.xlu0.b32.cont [13/16] 0.0, 128
        %286 = vxpose.xlu0.b32.cont [14/16] 0.0, 128
        %287 = vxpose.xlu0.b32.cont [15/16] 0.0, 128
        %288 = vxpose.xlu0.b32.end [16/16] 0.0, 128
        %v289 = vpop.trf.xlu0
        %v290 = vpop.trf.xlu0
        %v291 = vpop.trf.xlu0
        %v292 = vpop.trf.xlu0
        %v293 = vpop.trf.xlu0
        %v294 = vpop.trf.xlu0
        %v295 = vpop.trf.xlu0
        %v296 = vpop.trf.xlu0
        %v297 = vpop.trf.xlu0
        %v298 = vpop.trf.xlu0
        %v299 = vpop.trf.xlu0
        %v300 = vpop.trf.xlu0
        %v301 = vpop.trf.xlu0
        %v302 = vpop.trf.xlu0
        %v303 = vpop.trf.xlu0
        %v304 = vpop.trf.xlu0
        %vm305 = vcmask 130048
        %v307 = vsel %vm305, %v289, 0
        %v310 = vsel %vm305, %v290, 0
        %v313 = vsel %vm305, %v291, 0
        %v316 = vsel %vm305, %v292, 0
        %v319 = vsel %vm305, %v293, 0
        %v322 = vsel %vm305, %v294, 0
        %v325 = vsel %vm305, %v295, 0
        %v328 = vsel %vm305, %v296, 0
        %v331 = vsel %vm305, %v297, 0
        %v334 = vsel %vm305, %v298, 0
        %v337 = vsel %vm305, %v299, 0
        %v340 = vsel %vm305, %v300, 0
        %v343 = vsel %vm305, %v301, 0
        %v346 = vsel %vm305, %v302, 0
        %v349 = vsel %vm305, %v303, 0
        %v352 = vsel %vm305, %v304, 0
        %354 = vmatprep.subr.mxu0 0.0
        %355 = vmatpush1.msra.mxu0 %v269
        %356 = vmatprep.subr.mxu0 0.0
        %357 = vmatpush1.msra.mxu0 %v270
        %358 = vmatprep.subr.mxu0 0.0
        %359 = vmatpush1.msra.mxu0 0.0
        %360 = vmatprep.subr.mxu0 0.0
        %361 = vmatpush1.msra.mxu0 0.0
        %362 = vmatprep.subr.mxu0 0.0
        %363 = vmatpush1.msra.mxu0 0.0
        %364 = vmatprep.subr.mxu0 0.0
        %365 = vmatpush1.msra.mxu0 0.0
        %366 = vmatprep.subr.mxu0 0.0
        %367 = vmatpush1.msra.mxu0 0.0
        %368 = vmatprep.subr.mxu0 0.0
        %369 = vmatpush1.msra.mxu0 0.0
        %370 = vmatprep.subr.mxu0 0.0
        %371 = vmatpush1.msra.mxu0 0.0
        %372 = vmatprep.subr.mxu0 0.0
        %373 = vmatpush1.msra.mxu0 0.0
        %374 = vmatprep.subr.mxu0 0.0
        %375 = vmatpush1.msra.mxu0 0.0
        %376 = vmatprep.subr.mxu0 0.0
        %377 = vmatpush1.msra.mxu0 0.0
        %378 = vmatprep.subr.mxu0 0.0
        %379 = vmatpush1.msra.mxu0 0.0
        %380 = vmatprep.subr.mxu0 0.0
        %381 = vmatpush1.msra.mxu0 0.0
        %382 = vmatprep.subr.mxu0 0.0
        %383 = vmatpush1.msra.mxu0 0.0
        %384 = vmatprep.subr.mxu0 0.0
        %385 = vmatpush1.msra.mxu0 0.0
        %386 = vmatprep.subr.mxu0 0.0
        %387 = vmatpush1.msra.mxu0 0.0
        %388 = vmatprep.subr.mxu0 0.0
        %389 = vmatpush1.msra.mxu0 0.0
        %390 = vmatprep.subr.mxu0 0.0
        %391 = vmatpush1.msra.mxu0 0.0
        %392 = vmatprep.subr.mxu0 0.0
        %393 = vmatpush1.msra.mxu0 0.0
        %394 = vmatprep.subr.mxu0 0.0
        %395 = vmatpush1.msra.mxu0 0.0
        %396 = vmatprep.subr.mxu0 0.0
        %397 = vmatpush1.msra.mxu0 0.0
        %398 = vmatprep.subr.mxu0 0.0
        %399 = vmatpush1.msra.mxu0 0.0
        %400 = vmatprep.subr.mxu0 0.0
        %401 = vmatpush1.msra.mxu0 0.0
        %402 = vmatprep.subr.mxu0 0.0
        %403 = vmatpush1.msra.mxu0 0.0
        %404 = vmatprep.subr.mxu0 0.0
        %405 = vmatpush1.msra.mxu0 0.0
        %406 = vmatprep.subr.mxu0 0.0
        %407 = vmatpush1.msra.mxu0 0.0
        %408 = vmatprep.subr.mxu0 0.0
        %409 = vmatpush1.msra.mxu0 0.0
        %410 = vmatprep.subr.mxu0 0.0
        %411 = vmatpush1.msra.mxu0 0.0
        %412 = vmatprep.subr.mxu0 0.0
        %413 = vmatpush1.msra.mxu0 0.0
        %414 = vmatprep.subr.mxu0 0.0
        %415 = vmatpush1.msra.mxu0 0.0
        %416 = vmatprep.subr.mxu0 0.0
        %417 = vmatpush1.msra.mxu0 0.0
        %418 = vmatprep.mubr.f32.mxu0 0.0
        %419 = vmatmul.mubr.f32.gmra.mrb[0].mxu0 %v307
        %v420 = vpop.f32.mrb[0].mxu0
        %v421 = vadd.f32 0.0, %v420
        %v422 = vpop.f32.mrb[0].mxu0
        %423 = vmatprep.mubr.f32.mxu0 0.0
        %424 = vmatmul.mubr.f32.gmra.mrb[0].mxu0 %v310
        %v425 = vpop.f32.mrb[0].mxu0
        %v426 = vadd.f32 0.0, %v425
        %v427 = vpop.f32.mrb[0].mxu0
        %428 = vmatprep.mubr.f32.mxu0 0.0
        %429 = vmatmul.mubr.f32.gmra.mrb[0].mxu0 %v313
        %v430 = vpop.f32.mrb[0].mxu0
        %v431 = vadd.f32 0.0, %v430
        %v432 = vpop.f32.mrb[0].mxu0
        %433 = vmatprep.mubr.f32.mxu0 0.0
        %434 = vmatmul.mubr.f32.gmra.mrb[0].mxu0 %v316
        %v435 = vpop.f32.mrb[0].mxu0
        %v436 = vadd.f32 0.0, %v435
        %v437 = vpop.f32.mrb[0].mxu0
        %438 = vmatprep.mubr.f32.mxu0 0.0
        %439 = vmatmul.mubr.f32.gmra.mrb[0].mxu0 %v319
        %v440 = vpop.f32.mrb[0].mxu0
        %v441 = vadd.f32 0.0, %v440
        %v442 = vpop.f32.mrb[0].mxu0
        %443 = vmatprep.mubr.f32.mxu0 0.0
        %444 = vmatmul.mubr.f32.gmra.mrb[0].mxu0 %v322
        %v445 = vpop.f32.mrb[0].mxu0
        %v446 = vadd.f32 0.0, %v445
        %v447 = vpop.f32.mrb[0].mxu0
        %448 = vmatprep.mubr.f32.mxu0 0.0
        %449 = vmatmul.mubr.f32.gmra.mrb[0].mxu0 %v325
        %v450 = vpop.f32.mrb[0].mxu0
        %v451 = vadd.f32 0.0, %v450
        %v452 = vpop.f32.mrb[0].mxu0
        %453 = vmatprep.mubr.f32.mxu0 0.0
        %454 = vmatmul.mubr.f32.gmra.mrb[0].mxu0 %v328
        %v455 = vpop.f32.mrb[0].mxu0
        %v456 = vadd.f32 0.0, %v455
        %v457 = vpop.f32.mrb[0].mxu0
        %458 = vmatprep.mubr.f32.mxu0 0.0
        %459 = vmatmul.mubr.f32.gmra.mrb[0].mxu0 %v331
        %v460 = vpop.f32.mrb[0].mxu0
        %v461 = vadd.f32 0.0, %v460
        %v462 = vpop.f32.mrb[0].mxu0
        %463 = vmatprep.mubr.f32.mxu0 0.0
        %464 = vmatmul.mubr.f32.gmra.mrb[0].mxu0 %v334
        %v465 = vpop.f32.mrb[0].mxu0
        %v466 = vadd.f32 0.0, %v465
        %v467 = vpop.f32.mrb[0].mxu0
        %468 = vmatprep.mubr.f32.mxu0 0.0
        %469 = vmatmul.mubr.f32.gmra.mrb[0].mxu0 %v337
        %v470 = vpop.f32.mrb[0].mxu0
        %v471 = vadd.f32 0.0, %v470
        %v472 = vpop.f32.mrb[0].mxu0
        %473 = vmatprep.mubr.f32.mxu0 0.0
        %474 = vmatmul.mubr.f32.gmra.mrb[0].mxu0 %v340
        %v475 = vpop.f32.mrb[0].mxu0
        %v476 = vadd.f32 0.0, %v475
        %v477 = vpop.f32.mrb[0].mxu0
        %478 = vmatprep.mubr.f32.mxu0 0.0
        %479 = vmatmul.mubr.f32.gmra.mrb[0].mxu0 %v343
        %v480 = vpop.f32.mrb[0].mxu0
        %v481 = vadd.f32 0.0, %v480
        %v482 = vpop.f32.mrb[0].mxu0
        %483 = vmatprep.mubr.f32.mxu0 0.0
        %484 = vmatmul.mubr.f32.gmra.mrb[0].mxu0 %v346
        %v485 = vpop.f32.mrb[0].mxu0
        %v486 = vadd.f32 0.0, %v485
        %v487 = vpop.f32.mrb[0].mxu0
        %488 = vmatprep.mubr.f32.mxu0 0.0
        %489 = vmatmul.mubr.f32.gmra.mrb[0].mxu0 %v349
        %v490 = vpop.f32.mrb[0].mxu0
        %v491 = vadd.f32 0.0, %v490
        %v492 = vpop.f32.mrb[0].mxu0
        %493 = vmatprep.mubr.f32.mxu0 0.0
        %494 = vmatmul.mubr.f32.gmra.mrb[0].mxu0 %v352
        %v495 = vpop.f32.mrb[0].mxu0
        %v496 = vadd.f32 0.0, %v495
        %v497 = vpop.f32.mrb[0].mxu0
        %498 = vdwg.mxu0
        %499 = vxpose.xlu0.b32.start [1/16] %v271, 128
        %500 = vxpose.xlu0.b32.cont [2/16] %v272, 128
        %501 = vxpose.xlu0.b32.cont [3/16] 0.0, 128
        %502 = vxpose.xlu0.b32.cont [4/16] 0.0, 128
        %503 = vxpose.xlu0.b32.cont [5/16] 0.0, 128
        %504 = vxpose.xlu0.b32.cont [6/16] 0.0, 128
        %505 = vxpose.xlu0.b32.cont [7/16] 0.0, 128
        %506 = vxpose.xlu0.b32.cont [8/16] 0.0, 128
        %507 = vxpose.xlu0.b32.cont [9/16] 0.0, 128
        %508 = vxpose.xlu0.b32.cont [10/16] 0.0, 128
        %509 = vxpose.xlu0.b32.cont [11/16] 0.0, 128
        %510 = vxpose.xlu0.b32.cont [12/16] 0.0, 128
        %511 = vxpose.xlu0.b32.cont [13/16] 0.0, 128
        %512 = vxpose.xlu0.b32.cont [14/16] 0.0, 128
        %513 = vxpose.xlu0.b32.cont [15/16] 0.0, 128
        %514 = vxpose.xlu0.b32.end [16/16] 0.0, 128
        %v515 = vpop.trf.xlu0
        %v516 = vpop.trf.xlu0
        %v517 = vpop.trf.xlu0
        %v518 = vpop.trf.xlu0
        %v519 = vpop.trf.xlu0
        %v520 = vpop.trf.xlu0
        %v521 = vpop.trf.xlu0
        %v522 = vpop.trf.xlu0
        %v523 = vpop.trf.xlu0
        %v524 = vpop.trf.xlu0
        %v525 = vpop.trf.xlu0
        %v526 = vpop.trf.xlu0
        %v527 = vpop.trf.xlu0
        %v528 = vpop.trf.xlu0
        %v529 = vpop.trf.xlu0
        %v530 = vpop.trf.xlu0
        %v532 = vsel %vm305, %v515, 0
        %v535 = vsel %vm305, %v516, 0
        %v538 = vsel %vm305, %v517, 0
        %v541 = vsel %vm305, %v518, 0
        %v544 = vsel %vm305, %v519, 0
        %v547 = vsel %vm305, %v520, 0
        %v550 = vsel %vm305, %v521, 0
        %v553 = vsel %vm305, %v522, 0
        %v556 = vsel %vm305, %v523, 0
        %v559 = vsel %vm305, %v524, 0
        %v562 = vsel %vm305, %v525, 0
        %v565 = vsel %vm305, %v526, 0
        %v568 = vsel %vm305, %v527, 0
        %v571 = vsel %vm305, %v528, 0
        %v574 = vsel %vm305, %v529, 0
        %v577 = vsel %vm305, %v530, 0
        %579 = vmatprep.subr.mxu0 0.0
        %580 = vmatpush1.msra.mxu0 %v271
        %581 = vmatprep.subr.mxu0 0.0
        %582 = vmatpush1.msra.mxu0 %v272
        %583 = vmatprep.subr.mxu0 0.0
        %584 = vmatpush1.msra.mxu0 0.0
        %585 = vmatprep.subr.mxu0 0.0
        %586 = vmatpush1.msra.mxu0 0.0
        %587 = vmatprep.subr.mxu0 0.0
        %588 = vmatpush1.msra.mxu0 0.0
        %589 = vmatprep.subr.mxu0 0.0
        %590 = vmatpush1.msra.mxu0 0.0
        %591 = vmatprep.subr.mxu0 0.0
        %592 = vmatpush1.msra.mxu0 0.0
        %593 = vmatprep.subr.mxu0 0.0
        %594 = vmatpush1.msra.mxu0 0.0
        %595 = vmatprep.subr.mxu0 0.0
        %596 = vmatpush1.msra.mxu0 0.0
        %597 = vmatprep.subr.mxu0 0.0
        %598 = vmatpush1.msra.mxu0 0.0
        %599 = vmatprep.subr.mxu0 0.0
        %600 = vmatpush1.msra.mxu0 0.0
        %601 = vmatprep.subr.mxu0 0.0
        %602 = vmatpush1.msra.mxu0 0.0
        %603 = vmatprep.subr.mxu0 0.0
        %604 = vmatpush1.msra.mxu0 0.0
        %605 = vmatprep.subr.mxu0 0.0
        %606 = vmatpush1.msra.mxu0 0.0
        %607 = vmatprep.subr.mxu0 0.0
        %608 = vmatpush1.msra.mxu0 0.0
        %609 = vmatprep.subr.mxu0 0.0
        %610 = vmatpush1.msra.mxu0 0.0
        %611 = vmatprep.subr.mxu0 0.0
        %612 = vmatpush1.msra.mxu0 0.0
        %613 = vmatprep.subr.mxu0 0.0
        %614 = vmatpush1.msra.mxu0 0.0
        %615 = vmatprep.subr.mxu0 0.0
        %616 = vmatpush1.msra.mxu0 0.0
        %617 = vmatprep.subr.mxu0 0.0
        %618 = vmatpush1.msra.mxu0 0.0
        %619 = vmatprep.subr.mxu0 0.0
        %620 = vmatpush1.msra.mxu0 0.0
        %621 = vmatprep.subr.mxu0 0.0
        %622 = vmatpush1.msra.mxu0 0.0
        %623 = vmatprep.subr.mxu0 0.0
        %624 = vmatpush1.msra.mxu0 0.0
        %625 = vmatprep.subr.mxu0 0.0
        %626 = vmatpush1.msra.mxu0 0.0
        %627 = vmatprep.subr.mxu0 0.0
        %628 = vmatpush1.msra.mxu0 0.0
        %629 = vmatprep.subr.mxu0 0.0
        %630 = vmatpush1.msra.mxu0 0.0
        %631 = vmatprep.subr.mxu0 0.0
        %632 = vmatpush1.msra.mxu0 0.0
        %633 = vmatprep.subr.mxu0 0.0
        %634 = vmatpush1.msra.mxu0 0.0
        %635 = vmatprep.subr.mxu0 0.0
        %636 = vmatpush1.msra.mxu0 0.0
        %637 = vmatprep.subr.mxu0 0.0
        %638 = vmatpush1.msra.mxu0 0.0
        %639 = vmatprep.subr.mxu0 0.0
        %640 = vmatpush1.msra.mxu0 0.0
        %641 = vmatprep.subr.mxu0 0.0
        %642 = vmatpush1.msra.mxu0 0.0
        %643 = vmatprep.mubr.f32.mxu0 0.0
        %644 = vmatmul.mubr.f32.gmra.mrb[0].mxu0 %v532
        %v645 = vpop.f32.mrb[0].mxu0
        %v646 = vadd.f32 0.0, %v645
        %v647 = vpop.f32.mrb[0].mxu0
        %648 = vmatprep.mubr.f32.mxu0 0.0
        %649 = vmatmul.mubr.f32.gmra.mrb[0].mxu0 %v535
        %v650 = vpop.f32.mrb[0].mxu0
        %v651 = vadd.f32 0.0, %v650
        %v652 = vpop.f32.mrb[0].mxu0
        %653 = vmatprep.mubr.f32.mxu0 0.0
        %654 = vmatmul.mubr.f32.gmra.mrb[0].mxu0 %v538
        %v655 = vpop.f32.mrb[0].mxu0
        %v656 = vadd.f32 0.0, %v655
        %v657 = vpop.f32.mrb[0].mxu0
        %658 = vmatprep.mubr.f32.mxu0 0.0
        %659 = vmatmul.mubr.f32.gmra.mrb[0].mxu0 %v541
        %v660 = vpop.f32.mrb[0].mxu0
        %v661 = vadd.f32 0.0, %v660
        %v662 = vpop.f32.mrb[0].mxu0
        %663 = vmatprep.mubr.f32.mxu0 0.0
        %664 = vmatmul.mubr.f32.gmra.mrb[0].mxu0 %v544
        %v665 = vpop.f32.mrb[0].mxu0
        %v666 = vadd.f32 0.0, %v665
        %v667 = vpop.f32.mrb[0].mxu0
        %668 = vmatprep.mubr.f32.mxu0 0.0
        %669 = vmatmul.mubr.f32.gmra.mrb[0].mxu0 %v547
        %v670 = vpop.f32.mrb[0].mxu0
        %v671 = vadd.f32 0.0, %v670
        %v672 = vpop.f32.mrb[0].mxu0
        %673 = vmatprep.mubr.f32.mxu0 0.0
        %674 = vmatmul.mubr.f32.gmra.mrb[0].mxu0 %v550
        %v675 = vpop.f32.mrb[0].mxu0
        %v676 = vadd.f32 0.0, %v675
        %v677 = vpop.f32.mrb[0].mxu0
        %678 = vmatprep.mubr.f32.mxu0 0.0
        %679 = vmatmul.mubr.f32.gmra.mrb[0].mxu0 %v553
        %v680 = vpop.f32.mrb[0].mxu0
        %v681 = vadd.f32 0.0, %v680
        %v682 = vpop.f32.mrb[0].mxu0
        %683 = vmatprep.mubr.f32.mxu0 0.0
        %684 = vmatmul.mubr.f32.gmra.mrb[0].mxu0 %v556
        %v685 = vpop.f32.mrb[0].mxu0
        %v686 = vadd.f32 0.0, %v685
        %v687 = vpop.f32.mrb[0].mxu0
        %688 = vmatprep.mubr.f32.mxu0 0.0
        %689 = vmatmul.mubr.f32.gmra.mrb[0].mxu0 %v559
        %v690 = vpop.f32.mrb[0].mxu0
        %v691 = vadd.f32 0.0, %v690
        %v692 = vpop.f32.mrb[0].mxu0
        %693 = vmatprep.mubr.f32.mxu0 0.0
        %694 = vmatmul.mubr.f32.gmra.mrb[0].mxu0 %v562
        %v695 = vpop.f32.mrb[0].mxu0
        %v696 = vadd.f32 0.0, %v695
        %v697 = vpop.f32.mrb[0].mxu0
        %698 = vmatprep.mubr.f32.mxu0 0.0
        %699 = vmatmul.mubr.f32.gmra.mrb[0].mxu0 %v565
        %v700 = vpop.f32.mrb[0].mxu0
        %v701 = vadd.f32 0.0, %v700
        %v702 = vpop.f32.mrb[0].mxu0
        %703 = vmatprep.mubr.f32.mxu0 0.0
        %704 = vmatmul.mubr.f32.gmra.mrb[0].mxu0 %v568
        %v705 = vpop.f32.mrb[0].mxu0
        %v706 = vadd.f32 0.0, %v705
        %v707 = vpop.f32.mrb[0].mxu0
        %708 = vmatprep.mubr.f32.mxu0 0.0
        %709 = vmatmul.mubr.f32.gmra.mrb[0].mxu0 %v571
        %v710 = vpop.f32.mrb[0].mxu0
        %v711 = vadd.f32 0.0, %v710
        %v712 = vpop.f32.mrb[0].mxu0
        %713 = vmatprep.mubr.f32.mxu0 0.0
        %714 = vmatmul.mubr.f32.gmra.mrb[0].mxu0 %v574
        %v715 = vpop.f32.mrb[0].mxu0
        %v716 = vadd.f32 0.0, %v715
        %v717 = vpop.f32.mrb[0].mxu0
        %718 = vmatprep.mubr.f32.mxu0 0.0
        %719 = vmatmul.mubr.f32.gmra.mrb[0].mxu0 %v577
        %v720 = vpop.f32.mrb[0].mxu0
        %v721 = vadd.f32 0.0, %v720
        %v722 = vpop.f32.mrb[0].mxu0
        %723 = vdwg.mxu0
        %v724 = vlaneseq
        %v725 = vshrl.u32 %v724, 7
        %v726 = vsub.s32 0, %v725
        %v727 = vrot.slane %v270, %v726
        %729 = vbcast.lane.b32.xlu0 %v727, 256
        %v730 = vpop.permute.xlu0 %729
        %s732 = sor.u32 256, 8
        %733 = vbcast.lane.b32.xlu0 %v727, %s732
        %v734 = vpop.permute.xlu0 %733
        %s736 = sor.u32 256, 16
        %737 = vbcast.lane.b32.xlu0 %v727, %s736
        %v738 = vpop.permute.xlu0 %737
        %s740 = sor.u32 256, 24
        %741 = vbcast.lane.b32.xlu0 %v727, %s740
        %v742 = vpop.permute.xlu0 %741
        %s744 = sor.u32 256, 32
        %745 = vbcast.lane.b32.xlu0 %v727, %s744
        %v746 = vpop.permute.xlu0 %745
        %s748 = sor.u32 256, 40
        %749 = vbcast.lane.b32.xlu0 %v727, %s748
        %v750 = vpop.permute.xlu0 %749
        %s752 = sor.u32 256, 48
        %753 = vbcast.lane.b32.xlu0 %v727, %s752
        %v754 = vpop.permute.xlu0 %753
        %s756 = sor.u32 256, 56
        %757 = vbcast.lane.b32.xlu0 %v727, %s756
        %v758 = vpop.permute.xlu0 %757
        %s760 = sor.u32 256, 64
        %761 = vbcast.lane.b32.xlu0 %v727, %s760
        %v762 = vpop.permute.xlu0 %761
        %s764 = sor.u32 256, 72
        %765 = vbcast.lane.b32.xlu0 %v727, %s764
        %v766 = vpop.permute.xlu0 %765
        %s768 = sor.u32 256, 80
        %769 = vbcast.lane.b32.xlu0 %v727, %s768
        %v770 = vpop.permute.xlu0 %769
        %s772 = sor.u32 256, 88
        %773 = vbcast.lane.b32.xlu0 %v727, %s772
        %v774 = vpop.permute.xlu0 %773
        %s776 = sor.u32 256, 96
        %777 = vbcast.lane.b32.xlu0 %v727, %s776
        %v778 = vpop.permute.xlu0 %777
        %s780 = sor.u32 256, 104
        %781 = vbcast.lane.b32.xlu0 %v727, %s780
        %v782 = vpop.permute.xlu0 %781
        %s784 = sor.u32 256, 112
        %785 = vbcast.lane.b32.xlu0 %v727, %s784
        %v786 = vpop.permute.xlu0 %785
        %s788 = sor.u32 256, 120
        %789 = vbcast.lane.b32.xlu0 %v727, %s788
        %v790 = vpop.permute.xlu0 %789
        %v791 = vlaneseq
        %v792 = vshrl.u32 %v791, 7
        %v793 = vsub.s32 0, %v792
        %v794 = vrot.slane %v272, %v793
        %796 = vbcast.lane.b32.xlu0 %v794, 256
        %v797 = vpop.permute.xlu0 %796
        %s799 = sor.u32 256, 8
        %800 = vbcast.lane.b32.xlu0 %v794, %s799
        %v801 = vpop.permute.xlu0 %800
        %s803 = sor.u32 256, 16
        %804 = vbcast.lane.b32.xlu0 %v794, %s803
        %v805 = vpop.permute.xlu0 %804
        %s807 = sor.u32 256, 24
        %808 = vbcast.lane.b32.xlu0 %v794, %s807
        %v809 = vpop.permute.xlu0 %808
        %s811 = sor.u32 256, 32
        %812 = vbcast.lane.b32.xlu0 %v794, %s811
        %v813 = vpop.permute.xlu0 %812
        %s815 = sor.u32 256, 40
        %816 = vbcast.lane.b32.xlu0 %v794, %s815
        %v817 = vpop.permute.xlu0 %816
        %s819 = sor.u32 256, 48
        %820 = vbcast.lane.b32.xlu0 %v794, %s819
        %v821 = vpop.permute.xlu0 %820
        %s823 = sor.u32 256, 56
        %824 = vbcast.lane.b32.xlu0 %v794, %s823
        %v825 = vpop.permute.xlu0 %824
        %s827 = sor.u32 256, 64
        %828 = vbcast.lane.b32.xlu0 %v794, %s827
        %v829 = vpop.permute.xlu0 %828
        %s831 = sor.u32 256, 72
        %832 = vbcast.lane.b32.xlu0 %v794, %s831
        %v833 = vpop.permute.xlu0 %832
        %s835 = sor.u32 256, 80
        %836 = vbcast.lane.b32.xlu0 %v794, %s835
        %v837 = vpop.permute.xlu0 %836
        %s839 = sor.u32 256, 88
        %840 = vbcast.lane.b32.xlu0 %v794, %s839
        %v841 = vpop.permute.xlu0 %840
        %s843 = sor.u32 256, 96
        %844 = vbcast.lane.b32.xlu0 %v794, %s843
        %v845 = vpop.permute.xlu0 %844
        %s847 = sor.u32 256, 104
        %848 = vbcast.lane.b32.xlu0 %v794, %s847
        %v849 = vpop.permute.xlu0 %848
        %s851 = sor.u32 256, 112
        %852 = vbcast.lane.b32.xlu0 %v794, %s851
        %v853 = vpop.permute.xlu0 %852
        %s855 = sor.u32 256, 120
        %856 = vbcast.lane.b32.xlu0 %v794, %s855
        %v857 = vpop.permute.xlu0 %856
        %v858 = vmul.f32 %v730, %v727
        %v859 = vmul.f32 %v734, %v727
        %v860 = vmul.f32 %v738, %v727
        %v861 = vmul.f32 %v742, %v727
        %v862 = vmul.f32 %v746, %v727
        %v863 = vmul.f32 %v750, %v727
        %v864 = vmul.f32 %v754, %v727
        %v865 = vmul.f32 %v758, %v727
        %v866 = vmul.f32 %v762, %v727
        %v867 = vmul.f32 %v766, %v727
        %v868 = vmul.f32 %v770, %v727
        %v869 = vmul.f32 %v774, %v727
        %v870 = vmul.f32 %v778, %v727
        %v871 = vmul.f32 %v782, %v727
        %v872 = vmul.f32 %v786, %v727
        %v873 = vmul.f32 %v790, %v727
        %v874 = vmul.f32 %v797, %v794
        %v875 = vmul.f32 %v801, %v794
        %v876 = vmul.f32 %v805, %v794
        %v877 = vmul.f32 %v809, %v794
        %v878 = vmul.f32 %v813, %v794
        %v879 = vmul.f32 %v817, %v794
        %v880 = vmul.f32 %v821, %v794
        %v881 = vmul.f32 %v825, %v794
        %v882 = vmul.f32 %v829, %v794
        %v883 = vmul.f32 %v833, %v794
        %v884 = vmul.f32 %v837, %v794
        %v885 = vmul.f32 %v841, %v794
        %v886 = vmul.f32 %v845, %v794
        %v887 = vmul.f32 %v849, %v794
        %v888 = vmul.f32 %v853, %v794
        %v889 = vmul.f32 %v857, %v794
        %v890 = vsub.f32 %v421, %v858
        %v891 = vsub.f32 %v426, %v859
        %v892 = vsub.f32 %v431, %v860
        %v893 = vsub.f32 %v436, %v861
        %v894 = vsub.f32 %v441, %v862
        %v895 = vsub.f32 %v446, %v863
        %v896 = vsub.f32 %v451, %v864
        %v897 = vsub.f32 %v456, %v865
        %v898 = vsub.f32 %v461, %v866
        %v899 = vsub.f32 %v466, %v867
        %v900 = vsub.f32 %v471, %v868
        %v901 = vsub.f32 %v476, %v869
        %v902 = vsub.f32 %v481, %v870
        %v903 = vsub.f32 %v486, %v871
        %v904 = vsub.f32 %v491, %v872
        %v905 = vsub.f32 %v496, %v873
        %v906 = vsub.f32 %v646, %v874
        %v907 = vsub.f32 %v651, %v875
        %v908 = vsub.f32 %v656, %v876
        %v909 = vsub.f32 %v661, %v877
        %v910 = vsub.f32 %v666, %v878
        %v911 = vsub.f32 %v671, %v879
        %v912 = vsub.f32 %v676, %v880
        %v913 = vsub.f32 %v681, %v881
        %v914 = vsub.f32 %v686, %v882
        %v915 = vsub.f32 %v691, %v883
        %v916 = vsub.f32 %v696, %v884
        %v917 = vsub.f32 %v701, %v885
        %v918 = vsub.f32 %v706, %v886
        %v919 = vsub.f32 %v711, %v887
        %v920 = vsub.f32 %v716, %v888
        %v921 = vsub.f32 %v721, %v889
        %v922 = vld [vmem:[%s223] sm:$0xff]
        %v923 = vld [vmem:[%s223 + $0x8] sm:$0xff]
        %v924 = vld [vmem:[%s223 + $0x10] sm:$0xff]
        %v925 = vld [vmem:[%s223 + $0x18] sm:$0xff]
        %v926 = vld [vmem:[%s223 + $0x20] sm:$0xff]
        %v927 = vld [vmem:[%s223 + $0x28] sm:$0xff]
        %v928 = vld [vmem:[%s223 + $0x30] sm:$0xff]
        %v929 = vld [vmem:[%s223 + $0x38] sm:$0xff]
        %v930 = vld [vmem:[%s223 + $0x40] sm:$0xff]
        %v931 = vld [vmem:[%s223 + $0x48] sm:$0xff]
        %v932 = vld [vmem:[%s223 + $0x50] sm:$0xff]
        %v933 = vld [vmem:[%s223 + $0x58] sm:$0xff]
        %v934 = vld [vmem:[%s223 + $0x60] sm:$0xff]
        %v935 = vld [vmem:[%s223 + $0x68] sm:$0xff]
        %v936 = vld [vmem:[%s223 + $0x70] sm:$0xff]
        %v937 = vld [vmem:[%s223 + $0x78] sm:$0xff]
        %v938 = vld [vmem:[%s223 + $0x80] sm:$0xff]
        %v939 = vld [vmem:[%s223 + $0x88] sm:$0xff]
        %v940 = vld [vmem:[%s223 + $0x90] sm:$0xff]
        %v941 = vld [vmem:[%s223 + $0x98] sm:$0xff]
        %v942 = vld [vmem:[%s223 + $0xa0] sm:$0xff]
        %v943 = vld [vmem:[%s223 + $0xa8] sm:$0xff]
        %v944 = vld [vmem:[%s223 + $0xb0] sm:$0xff]
        %v945 = vld [vmem:[%s223 + $0xb8] sm:$0xff]
        %v946 = vld [vmem:[%s223 + $0xc0] sm:$0xff]
        %v947 = vld [vmem:[%s223 + $0xc8] sm:$0xff]
        %v948 = vld [vmem:[%s223 + $0xd0] sm:$0xff]
        %v949 = vld [vmem:[%s223 + $0xd8] sm:$0xff]
        %v950 = vld [vmem:[%s223 + $0xe0] sm:$0xff]
        %v951 = vld [vmem:[%s223 + $0xe8] sm:$0xff]
        %v952 = vld [vmem:[%s223 + $0xf0] sm:$0xff]
        %v953 = vld [vmem:[%s223 + $0xf8] sm:$0xff]
        %954 = vmatprep.subr.mxu0 0.0
        %955 = vmatpush1.xpose.msra.mxu0 %v922
        %956 = vmatprep.subr.mxu0 0.0
        %957 = vmatpush1.xpose.msra.mxu0 %v923
        %958 = vmatprep.subr.mxu0 0.0
        %959 = vmatpush1.xpose.msra.mxu0 %v924
        %960 = vmatprep.subr.mxu0 0.0
        %961 = vmatpush1.xpose.msra.mxu0 %v925
        %962 = vmatprep.subr.mxu0 0.0
        %963 = vmatpush1.xpose.msra.mxu0 %v926
        %964 = vmatprep.subr.mxu0 0.0
        %965 = vmatpush1.xpose.msra.mxu0 %v927
        %966 = vmatprep.subr.mxu0 0.0
        %967 = vmatpush1.xpose.msra.mxu0 %v928
        %968 = vmatprep.subr.mxu0 0.0
        %969 = vmatpush1.xpose.msra.mxu0 %v929
        %970 = vmatprep.subr.mxu0 0.0
        %971 = vmatpush1.xpose.msra.mxu0 %v930
        %972 = vmatprep.subr.mxu0 0.0
        %973 = vmatpush1.xpose.msra.mxu0 %v931
        %974 = vmatprep.subr.mxu0 0.0
        %975 = vmatpush1.xpose.msra.mxu0 %v932
        %976 = vmatprep.subr.mxu0 0.0
        %977 = vmatpush1.xpose.msra.mxu0 %v933
        %978 = vmatprep.subr.mxu0 0.0
        %979 = vmatpush1.xpose.msra.mxu0 %v934
        %980 = vmatprep.subr.mxu0 0.0
        %981 = vmatpush1.xpose.msra.mxu0 %v935
        %982 = vmatprep.subr.mxu0 0.0
        %983 = vmatpush1.xpose.msra.mxu0 %v936
        %984 = vmatprep.subr.mxu0 0.0
        %985 = vmatpush1.xpose.msra.mxu0 %v937
        %986 = vmatprep.subr.mxu0 0.0
        %987 = vmatpush1.xpose.msra.mxu0 %v938
        %988 = vmatprep.subr.mxu0 0.0
        %989 = vmatpush1.xpose.msra.mxu0 %v939
        %990 = vmatprep.subr.mxu0 0.0
        %991 = vmatpush1.xpose.msra.mxu0 %v940
        %992 = vmatprep.subr.mxu0 0.0
        %993 = vmatpush1.xpose.msra.mxu0 %v941
        %994 = vmatprep.subr.mxu0 0.0
        %995 = vmatpush1.xpose.msra.mxu0 %v942
        %996 = vmatprep.subr.mxu0 0.0
        %997 = vmatpush1.xpose.msra.mxu0 %v943
        %998 = vmatprep.subr.mxu0 0.0
        %999 = vmatpush1.xpose.msra.mxu0 %v944
        %1000 = vmatprep.subr.mxu0 0.0
        %1001 = vmatpush1.xpose.msra.mxu0 %v945
        %1002 = vmatprep.subr.mxu0 0.0
        %1003 = vmatpush1.xpose.msra.mxu0 %v946
        %1004 = vmatprep.subr.mxu0 0.0
        %1005 = vmatpush1.xpose.msra.mxu0 %v947
        %1006 = vmatprep.subr.mxu0 0.0
        %1007 = vmatpush1.xpose.msra.mxu0 %v948
        %1008 = vmatprep.subr.mxu0 0.0
        %1009 = vmatpush1.xpose.msra.mxu0 %v949
        %1010 = vmatprep.subr.mxu0 0.0
        %1011 = vmatpush1.xpose.msra.mxu0 %v950
        %1012 = vmatprep.subr.mxu0 0.0
        %1013 = vmatpush1.xpose.msra.mxu0 %v951
        %1014 = vmatprep.subr.mxu0 0.0
        %1015 = vmatpush1.xpose.msra.mxu0 %v952
        %1016 = vmatprep.subr.mxu0 0.0
        %1017 = vmatpush1.xpose.msra.mxu0 %v953
        %1018 = vmatprep.mubr.f32.mxu0 0.0
        %1019 = vmatmul.mubr.f32.gmra.mrb[0].mxu0 %v890
        %v1020 = vpop.f32.mrb[0].mxu0
        %v1021 = vadd.f32 0.0, %v1020
        %v1022 = vpop.f32.mrb[0].mxu0
        %v1023 = vadd.f32 0.0, %v1022
        %1024 = vmatprep.mubr.f32.mxu0 0.0
        %1025 = vmatmul.mubr.f32.gmra.mrb[0].mxu0 %v891
        %v1026 = vpop.f32.mrb[0].mxu0
        %v1027 = vadd.f32 0.0, %v1026
        %v1028 = vpop.f32.mrb[0].mxu0
        %v1029 = vadd.f32 0.0, %v1028
        %1030 = vmatprep.mubr.f32.mxu0 0.0
        %1031 = vmatmul.mubr.f32.gmra.mrb[0].mxu0 %v892
        %v1032 = vpop.f32.mrb[0].mxu0
        %v1033 = vadd.f32 0.0, %v1032
        %v1034 = vpop.f32.mrb[0].mxu0
        %v1035 = vadd.f32 0.0, %v1034
        %1036 = vmatprep.mubr.f32.mxu0 0.0
        %1037 = vmatmul.mubr.f32.gmra.mrb[0].mxu0 %v893
        %v1038 = vpop.f32.mrb[0].mxu0
        %v1039 = vadd.f32 0.0, %v1038
        %v1040 = vpop.f32.mrb[0].mxu0
        %v1041 = vadd.f32 0.0, %v1040
        %1042 = vmatprep.mubr.f32.mxu0 0.0
        %1043 = vmatmul.mubr.f32.gmra.mrb[0].mxu0 %v894
        %v1044 = vpop.f32.mrb[0].mxu0
        %v1045 = vadd.f32 0.0, %v1044
        %v1046 = vpop.f32.mrb[0].mxu0
        %v1047 = vadd.f32 0.0, %v1046
        %1048 = vmatprep.mubr.f32.mxu0 0.0
        %1049 = vmatmul.mubr.f32.gmra.mrb[0].mxu0 %v895
        %v1050 = vpop.f32.mrb[0].mxu0
        %v1051 = vadd.f32 0.0, %v1050
        %v1052 = vpop.f32.mrb[0].mxu0
        %v1053 = vadd.f32 0.0, %v1052
        %1054 = vmatprep.mubr.f32.mxu0 0.0
        %1055 = vmatmul.mubr.f32.gmra.mrb[0].mxu0 %v896
        %v1056 = vpop.f32.mrb[0].mxu0
        %v1057 = vadd.f32 0.0, %v1056
        %v1058 = vpop.f32.mrb[0].mxu0
        %v1059 = vadd.f32 0.0, %v1058
        %1060 = vmatprep.mubr.f32.mxu0 0.0
        %1061 = vmatmul.mubr.f32.gmra.mrb[0].mxu0 %v897
        %v1062 = vpop.f32.mrb[0].mxu0
        %v1063 = vadd.f32 0.0, %v1062
        %v1064 = vpop.f32.mrb[0].mxu0
        %v1065 = vadd.f32 0.0, %v1064
        %1066 = vmatprep.mubr.f32.mxu0 0.0
        %1067 = vmatmul.mubr.f32.gmra.mrb[0].mxu0 %v898
        %v1068 = vpop.f32.mrb[0].mxu0
        %v1069 = vadd.f32 0.0, %v1068
        %v1070 = vpop.f32.mrb[0].mxu0
        %v1071 = vadd.f32 0.0, %v1070
        %1072 = vmatprep.mubr.f32.mxu0 0.0
        %1073 = vmatmul.mubr.f32.gmra.mrb[0].mxu0 %v899
        %v1074 = vpop.f32.mrb[0].mxu0
        %v1075 = vadd.f32 0.0, %v1074
        %v1076 = vpop.f32.mrb[0].mxu0
        %v1077 = vadd.f32 0.0, %v1076
        %1078 = vmatprep.mubr.f32.mxu0 0.0
        %1079 = vmatmul.mubr.f32.gmra.mrb[0].mxu0 %v900
        %v1080 = vpop.f32.mrb[0].mxu0
        %v1081 = vadd.f32 0.0, %v1080
        %v1082 = vpop.f32.mrb[0].mxu0
        %v1083 = vadd.f32 0.0, %v1082
        %1084 = vmatprep.mubr.f32.mxu0 0.0
        %1085 = vmatmul.mubr.f32.gmra.mrb[0].mxu0 %v901
        %v1086 = vpop.f32.mrb[0].mxu0
        %v1087 = vadd.f32 0.0, %v1086
        %v1088 = vpop.f32.mrb[0].mxu0
        %v1089 = vadd.f32 0.0, %v1088
        %1090 = vmatprep.mubr.f32.mxu0 0.0
        %1091 = vmatmul.mubr.f32.gmra.mrb[0].mxu0 %v902
        %v1092 = vpop.f32.mrb[0].mxu0
        %v1093 = vadd.f32 0.0, %v1092
        %v1094 = vpop.f32.mrb[0].mxu0
        %v1095 = vadd.f32 0.0, %v1094
        %1096 = vmatprep.mubr.f32.mxu0 0.0
        %1097 = vmatmul.mubr.f32.gmra.mrb[0].mxu0 %v903
        %v1098 = vpop.f32.mrb[0].mxu0
        %v1099 = vadd.f32 0.0, %v1098
        %v1100 = vpop.f32.mrb[0].mxu0
        %v1101 = vadd.f32 0.0, %v1100
        %1102 = vmatprep.mubr.f32.mxu0 0.0
        %1103 = vmatmul.mubr.f32.gmra.mrb[0].mxu0 %v904
        %v1104 = vpop.f32.mrb[0].mxu0
        %v1105 = vadd.f32 0.0, %v1104
        %v1106 = vpop.f32.mrb[0].mxu0
        %v1107 = vadd.f32 0.0, %v1106
        %1108 = vmatprep.mubr.f32.mxu0 0.0
        %1109 = vmatmul.mubr.f32.gmra.mrb[0].mxu0 %v905
        %v1110 = vpop.f32.mrb[0].mxu0
        %v1111 = vadd.f32 0.0, %v1110
        %v1112 = vpop.f32.mrb[0].mxu0
        %v1113 = vadd.f32 0.0, %v1112
        %1114 = vmatprep.mubr.f32.mxu0 0.0
        %1115 = vmatmul.mubr.f32.gmra.mrb[0].mxu0 %v906
        %v1116 = vpop.f32.mrb[0].mxu0
        %v1117 = vadd.f32 0.0, %v1116
        %v1118 = vpop.f32.mrb[0].mxu0
        %v1119 = vadd.f32 0.0, %v1118
        %1120 = vmatprep.mubr.f32.mxu0 0.0
        %1121 = vmatmul.mubr.f32.gmra.mrb[0].mxu0 %v907
        %v1122 = vpop.f32.mrb[0].mxu0
        %v1123 = vadd.f32 0.0, %v1122
        %v1124 = vpop.f32.mrb[0].mxu0
        %v1125 = vadd.f32 0.0, %v1124
        %1126 = vmatprep.mubr.f32.mxu0 0.0
        %1127 = vmatmul.mubr.f32.gmra.mrb[0].mxu0 %v908
        %v1128 = vpop.f32.mrb[0].mxu0
        %v1129 = vadd.f32 0.0, %v1128
        %v1130 = vpop.f32.mrb[0].mxu0
        %v1131 = vadd.f32 0.0, %v1130
        %1132 = vmatprep.mubr.f32.mxu0 0.0
        %1133 = vmatmul.mubr.f32.gmra.mrb[0].mxu0 %v909
        %v1134 = vpop.f32.mrb[0].mxu0
        %v1135 = vadd.f32 0.0, %v1134
        %v1136 = vpop.f32.mrb[0].mxu0
        %v1137 = vadd.f32 0.0, %v1136
        %1138 = vmatprep.mubr.f32.mxu0 0.0
        %1139 = vmatmul.mubr.f32.gmra.mrb[0].mxu0 %v910
        %v1140 = vpop.f32.mrb[0].mxu0
        %v1141 = vadd.f32 0.0, %v1140
        %v1142 = vpop.f32.mrb[0].mxu0
        %v1143 = vadd.f32 0.0, %v1142
        %1144 = vmatprep.mubr.f32.mxu0 0.0
        %1145 = vmatmul.mubr.f32.gmra.mrb[0].mxu0 %v911
        %v1146 = vpop.f32.mrb[0].mxu0
        %v1147 = vadd.f32 0.0, %v1146
        %v1148 = vpop.f32.mrb[0].mxu0
        %v1149 = vadd.f32 0.0, %v1148
        %1150 = vmatprep.mubr.f32.mxu0 0.0
        %1151 = vmatmul.mubr.f32.gmra.mrb[0].mxu0 %v912
        %v1152 = vpop.f32.mrb[0].mxu0
        %v1153 = vadd.f32 0.0, %v1152
        %v1154 = vpop.f32.mrb[0].mxu0
        %v1155 = vadd.f32 0.0, %v1154
        %1156 = vmatprep.mubr.f32.mxu0 0.0
        %1157 = vmatmul.mubr.f32.gmra.mrb[0].mxu0 %v913
        %v1158 = vpop.f32.mrb[0].mxu0
        %v1159 = vadd.f32 0.0, %v1158
        %v1160 = vpop.f32.mrb[0].mxu0
        %v1161 = vadd.f32 0.0, %v1160
        %1162 = vmatprep.mubr.f32.mxu0 0.0
        %1163 = vmatmul.mubr.f32.gmra.mrb[0].mxu0 %v914
        %v1164 = vpop.f32.mrb[0].mxu0
        %v1165 = vadd.f32 0.0, %v1164
        %v1166 = vpop.f32.mrb[0].mxu0
        %v1167 = vadd.f32 0.0, %v1166
        %1168 = vmatprep.mubr.f32.mxu0 0.0
        %1169 = vmatmul.mubr.f32.gmra.mrb[0].mxu0 %v915
        %v1170 = vpop.f32.mrb[0].mxu0
        %v1171 = vadd.f32 0.0, %v1170
        %v1172 = vpop.f32.mrb[0].mxu0
        %v1173 = vadd.f32 0.0, %v1172
        %1174 = vmatprep.mubr.f32.mxu0 0.0
        %1175 = vmatmul.mubr.f32.gmra.mrb[0].mxu0 %v916
        %v1176 = vpop.f32.mrb[0].mxu0
        %v1177 = vadd.f32 0.0, %v1176
        %v1178 = vpop.f32.mrb[0].mxu0
        %v1179 = vadd.f32 0.0, %v1178
        %1180 = vmatprep.mubr.f32.mxu0 0.0
        %1181 = vmatmul.mubr.f32.gmra.mrb[0].mxu0 %v917
        %v1182 = vpop.f32.mrb[0].mxu0
        %v1183 = vadd.f32 0.0, %v1182
        %v1184 = vpop.f32.mrb[0].mxu0
        %v1185 = vadd.f32 0.0, %v1184
        %1186 = vmatprep.mubr.f32.mxu0 0.0
        %1187 = vmatmul.mubr.f32.gmra.mrb[0].mxu0 %v918
        %v1188 = vpop.f32.mrb[0].mxu0
        %v1189 = vadd.f32 0.0, %v1188
        %v1190 = vpop.f32.mrb[0].mxu0
        %v1191 = vadd.f32 0.0, %v1190
        %1192 = vmatprep.mubr.f32.mxu0 0.0
        %1193 = vmatmul.mubr.f32.gmra.mrb[0].mxu0 %v919
        %v1194 = vpop.f32.mrb[0].mxu0
        %v1195 = vadd.f32 0.0, %v1194
        %v1196 = vpop.f32.mrb[0].mxu0
        %v1197 = vadd.f32 0.0, %v1196
        %1198 = vmatprep.mubr.f32.mxu0 0.0
        %1199 = vmatmul.mubr.f32.gmra.mrb[0].mxu0 %v920
        %v1200 = vpop.f32.mrb[0].mxu0
        %v1201 = vadd.f32 0.0, %v1200
        %v1202 = vpop.f32.mrb[0].mxu0
        %v1203 = vadd.f32 0.0, %v1202
        %1204 = vmatprep.mubr.f32.mxu0 0.0
        %1205 = vmatmul.mubr.f32.gmra.mrb[0].mxu0 %v921
        %v1206 = vpop.f32.mrb[0].mxu0
        %v1207 = vadd.f32 0.0, %v1206
        %v1208 = vpop.f32.mrb[0].mxu0
        %v1209 = vadd.f32 0.0, %v1208
        %1210 = vdwg.mxu0
        %v1211 = vld [vmem:[%s232] sm:$0xff]
        %v1212 = vld [vmem:[%s232 + $0x8] sm:$0xff]
        %v1213 = vld [vmem:[%s232 + $0x10] sm:$0xff]
        %v1214 = vld [vmem:[%s232 + $0x18] sm:$0xff]
        %v1215 = vld [vmem:[%s232 + $0x20] sm:$0xff]
        %v1216 = vld [vmem:[%s232 + $0x28] sm:$0xff]
        %v1217 = vld [vmem:[%s232 + $0x30] sm:$0xff]
        %v1218 = vld [vmem:[%s232 + $0x38] sm:$0xff]
        %v1219 = vld [vmem:[%s232 + $0x40] sm:$0xff]
        %v1220 = vld [vmem:[%s232 + $0x48] sm:$0xff]
        %v1221 = vld [vmem:[%s232 + $0x50] sm:$0xff]
        %v1222 = vld [vmem:[%s232 + $0x58] sm:$0xff]
        %v1223 = vld [vmem:[%s232 + $0x60] sm:$0xff]
        %v1224 = vld [vmem:[%s232 + $0x68] sm:$0xff]
        %v1225 = vld [vmem:[%s232 + $0x70] sm:$0xff]
        %v1226 = vld [vmem:[%s232 + $0x78] sm:$0xff]
        %v1227 = vld [vmem:[%s232 + $0x80] sm:$0xff]
        %v1228 = vld [vmem:[%s232 + $0x88] sm:$0xff]
        %v1229 = vld [vmem:[%s232 + $0x90] sm:$0xff]
        %v1230 = vld [vmem:[%s232 + $0x98] sm:$0xff]
        %v1231 = vld [vmem:[%s232 + $0xa0] sm:$0xff]
        %v1232 = vld [vmem:[%s232 + $0xa8] sm:$0xff]
        %v1233 = vld [vmem:[%s232 + $0xb0] sm:$0xff]
        %v1234 = vld [vmem:[%s232 + $0xb8] sm:$0xff]
        %v1235 = vld [vmem:[%s232 + $0xc0] sm:$0xff]
        %v1236 = vld [vmem:[%s232 + $0xc8] sm:$0xff]
        %v1237 = vld [vmem:[%s232 + $0xd0] sm:$0xff]
        %v1238 = vld [vmem:[%s232 + $0xd8] sm:$0xff]
        %v1239 = vld [vmem:[%s232 + $0xe0] sm:$0xff]
        %v1240 = vld [vmem:[%s232 + $0xe8] sm:$0xff]
        %v1241 = vld [vmem:[%s232 + $0xf0] sm:$0xff]
        %v1242 = vld [vmem:[%s232 + $0xf8] sm:$0xff]
        %1243 = vxpose.xlu0.b32.start [1/16] %v1023, 128
        %1244 = vxpose.xlu0.b32.cont [2/16] %v1029, 128
        %1245 = vxpose.xlu0.b32.cont [3/16] %v1035, 128
        %1246 = vxpose.xlu0.b32.cont [4/16] %v1041, 128
        %1247 = vxpose.xlu0.b32.cont [5/16] %v1047, 128
        %1248 = vxpose.xlu0.b32.cont [6/16] %v1053, 128
        %1249 = vxpose.xlu0.b32.cont [7/16] %v1059, 128
        %1250 = vxpose.xlu0.b32.cont [8/16] %v1065, 128
        %1251 = vxpose.xlu0.b32.cont [9/16] %v1071, 128
        %1252 = vxpose.xlu0.b32.cont [10/16] %v1077, 128
        %1253 = vxpose.xlu0.b32.cont [11/16] %v1083, 128
        %1254 = vxpose.xlu0.b32.cont [12/16] %v1089, 128
        %1255 = vxpose.xlu0.b32.cont [13/16] %v1095, 128
        %1256 = vxpose.xlu0.b32.cont [14/16] %v1101, 128
        %1257 = vxpose.xlu0.b32.cont [15/16] %v1107, 128
        %1258 = vxpose.xlu0.b32.end [16/16] %v1113, 128
        %v1259 = vpop.trf.xlu0
        %v1260 = vpop.trf.xlu0
        %v1261 = vpop.trf.xlu0
        %v1262 = vpop.trf.xlu0
        %v1263 = vpop.trf.xlu0
        %v1264 = vpop.trf.xlu0
        %v1265 = vpop.trf.xlu0
        %v1266 = vpop.trf.xlu0
        %v1267 = vpop.trf.xlu0
        %v1268 = vpop.trf.xlu0
        %v1269 = vpop.trf.xlu0
        %v1270 = vpop.trf.xlu0
        %v1271 = vpop.trf.xlu0
        %v1272 = vpop.trf.xlu0
        %v1273 = vpop.trf.xlu0
        %v1274 = vpop.trf.xlu0
        %1275 = vxpose.xlu0.b32.start [1/16] %v1119, 128
        %1276 = vxpose.xlu0.b32.cont [2/16] %v1125, 128
        %1277 = vxpose.xlu0.b32.cont [3/16] %v1131, 128
        %1278 = vxpose.xlu0.b32.cont [4/16] %v1137, 128
        %1279 = vxpose.xlu0.b32.cont [5/16] %v1143, 128
        %1280 = vxpose.xlu0.b32.cont [6/16] %v1149, 128
        %1281 = vxpose.xlu0.b32.cont [7/16] %v1155, 128
        %1282 = vxpose.xlu0.b32.cont [8/16] %v1161, 128
        %1283 = vxpose.xlu0.b32.cont [9/16] %v1167, 128
        %1284 = vxpose.xlu0.b32.cont [10/16] %v1173, 128
        %1285 = vxpose.xlu0.b32.cont [11/16] %v1179, 128
        %1286 = vxpose.xlu0.b32.cont [12/16] %v1185, 128
        %1287 = vxpose.xlu0.b32.cont [13/16] %v1191, 128
        %1288 = vxpose.xlu0.b32.cont [14/16] %v1197, 128
        %1289 = vxpose.xlu0.b32.cont [15/16] %v1203, 128
        %1290 = vxpose.xlu0.b32.end [16/16] %v1209, 128
        %v1291 = vpop.trf.xlu0
        %v1292 = vpop.trf.xlu0
        %v1293 = vpop.trf.xlu0
        %v1294 = vpop.trf.xlu0
        %v1295 = vpop.trf.xlu0
        %v1296 = vpop.trf.xlu0
        %v1297 = vpop.trf.xlu0
        %v1298 = vpop.trf.xlu0
        %v1299 = vpop.trf.xlu0
        %v1300 = vpop.trf.xlu0
        %v1301 = vpop.trf.xlu0
        %v1302 = vpop.trf.xlu0
        %v1303 = vpop.trf.xlu0
        %v1304 = vpop.trf.xlu0
        %v1305 = vpop.trf.xlu0
        %v1306 = vpop.trf.xlu0
        %1307 = vmatprep.subr.mxu0 0.0
        %1308 = vmatpush1.xpose.msra.mxu0 %v1227
        %1309 = vmatprep.subr.mxu0 0.0
        %1310 = vmatpush1.xpose.msra.mxu0 %v1228
        %1311 = vmatprep.subr.mxu0 0.0
        %1312 = vmatpush1.xpose.msra.mxu0 %v1229
        %1313 = vmatprep.subr.mxu0 0.0
        %1314 = vmatpush1.xpose.msra.mxu0 %v1230
        %1315 = vmatprep.subr.mxu0 0.0
        %1316 = vmatpush1.xpose.msra.mxu0 %v1231
        %1317 = vmatprep.subr.mxu0 0.0
        %1318 = vmatpush1.xpose.msra.mxu0 %v1232
        %1319 = vmatprep.subr.mxu0 0.0
        %1320 = vmatpush1.xpose.msra.mxu0 %v1233
        %1321 = vmatprep.subr.mxu0 0.0
        %1322 = vmatpush1.xpose.msra.mxu0 %v1234
        %1323 = vmatprep.subr.mxu0 0.0
        %1324 = vmatpush1.xpose.msra.mxu0 %v1235
        %1325 = vmatprep.subr.mxu0 0.0
        %1326 = vmatpush1.xpose.msra.mxu0 %v1236
        %1327 = vmatprep.subr.mxu0 0.0
        %1328 = vmatpush1.xpose.msra.mxu0 %v1237
        %1329 = vmatprep.subr.mxu0 0.0
        %1330 = vmatpush1.xpose.msra.mxu0 %v1238
        %1331 = vmatprep.subr.mxu0 0.0
        %1332 = vmatpush1.xpose.msra.mxu0 %v1239
        %1333 = vmatprep.subr.mxu0 0.0
        %1334 = vmatpush1.xpose.msra.mxu0 %v1240
        %1335 = vmatprep.subr.mxu0 0.0
        %1336 = vmatpush1.xpose.msra.mxu0 %v1241
        %1337 = vmatprep.subr.mxu0 0.0
        %1338 = vmatpush1.xpose.msra.mxu0 %v1242
        %1339 = vmatprep.subr.mxu0 0.0
        %1340 = vmatpush1.xpose.msra.mxu0 0.0
        %1341 = vmatprep.subr.mxu0 0.0
        %1342 = vmatpush1.xpose.msra.mxu0 0.0
        %1343 = vmatprep.subr.mxu0 0.0
        %1344 = vmatpush1.xpose.msra.mxu0 0.0
        %1345 = vmatprep.subr.mxu0 0.0
        %1346 = vmatpush1.xpose.msra.mxu0 0.0
        %1347 = vmatprep.subr.mxu0 0.0
        %1348 = vmatpush1.xpose.msra.mxu0 0.0
        %1349 = vmatprep.subr.mxu0 0.0
        %1350 = vmatpush1.xpose.msra.mxu0 0.0
        %1351 = vmatprep.subr.mxu0 0.0
        %1352 = vmatpush1.xpose.msra.mxu0 0.0
        %1353 = vmatprep.subr.mxu0 0.0
        %1354 = vmatpush1.xpose.msra.mxu0 0.0
        %1355 = vmatprep.subr.mxu0 0.0
        %1356 = vmatpush1.xpose.msra.mxu0 0.0
        %1357 = vmatprep.subr.mxu0 0.0
        %1358 = vmatpush1.xpose.msra.mxu0 0.0
        %1359 = vmatprep.subr.mxu0 0.0
        %1360 = vmatpush1.xpose.msra.mxu0 0.0
        %1361 = vmatprep.subr.mxu0 0.0
        %1362 = vmatpush1.xpose.msra.mxu0 0.0
        %1363 = vmatprep.subr.mxu0 0.0
        %1364 = vmatpush1.xpose.msra.mxu0 0.0
        %1365 = vmatprep.subr.mxu0 0.0
        %1366 = vmatpush1.xpose.msra.mxu0 0.0
        %1367 = vmatprep.subr.mxu0 0.0
        %1368 = vmatpush1.xpose.msra.mxu0 0.0
        %1369 = vmatprep.subr.mxu0 0.0
        %1370 = vmatpush1.xpose.msra.mxu0 0.0
        %1371 = vmatprep.mubr.f32.mxu0 0.0
        %1372 = vmatmul.mubr.f32.gmra.mrb[0].mxu0 %v1259
        %v1373 = vpop.f32.mrb[0].mxu0
        %v1374 = vadd.f32 0.0, %v1373
        %v1375 = vpop.f32.mrb[0].mxu0
        %1376 = vmatprep.mubr.f32.mxu0 0.0
        %1377 = vmatmul.mubr.f32.gmra.mrb[0].mxu0 %v1260
        %v1378 = vpop.f32.mrb[0].mxu0
        %v1379 = vadd.f32 0.0, %v1378
        %v1380 = vpop.f32.mrb[0].mxu0
        %1381 = vmatprep.mubr.f32.mxu0 0.0
        %1382 = vmatmul.mubr.f32.gmra.mrb[0].mxu0 %v1261
        %v1383 = vpop.f32.mrb[0].mxu0
        %v1384 = vadd.f32 0.0, %v1383
        %v1385 = vpop.f32.mrb[0].mxu0
        %1386 = vmatprep.mubr.f32.mxu0 0.0
        %1387 = vmatmul.mubr.f32.gmra.mrb[0].mxu0 %v1262
        %v1388 = vpop.f32.mrb[0].mxu0
        %v1389 = vadd.f32 0.0, %v1388
        %v1390 = vpop.f32.mrb[0].mxu0
        %1391 = vmatprep.mubr.f32.mxu0 0.0
        %1392 = vmatmul.mubr.f32.gmra.mrb[0].mxu0 %v1263
        %v1393 = vpop.f32.mrb[0].mxu0
        %v1394 = vadd.f32 0.0, %v1393
        %v1395 = vpop.f32.mrb[0].mxu0
        %1396 = vmatprep.mubr.f32.mxu0 0.0
        %1397 = vmatmul.mubr.f32.gmra.mrb[0].mxu0 %v1264
        %v1398 = vpop.f32.mrb[0].mxu0
        %v1399 = vadd.f32 0.0, %v1398
        %v1400 = vpop.f32.mrb[0].mxu0
        %1401 = vmatprep.mubr.f32.mxu0 0.0
        %1402 = vmatmul.mubr.f32.gmra.mrb[0].mxu0 %v1265
        %v1403 = vpop.f32.mrb[0].mxu0
        %v1404 = vadd.f32 0.0, %v1403
        %v1405 = vpop.f32.mrb[0].mxu0
        %1406 = vmatprep.mubr.f32.mxu0 0.0
        %1407 = vmatmul.mubr.f32.gmra.mrb[0].mxu0 %v1266
        %v1408 = vpop.f32.mrb[0].mxu0
        %v1409 = vadd.f32 0.0, %v1408
        %v1410 = vpop.f32.mrb[0].mxu0
        %1411 = vmatprep.mubr.f32.mxu0 0.0
        %1412 = vmatmul.mubr.f32.gmra.mrb[0].mxu0 %v1267
        %v1413 = vpop.f32.mrb[0].mxu0
        %v1414 = vadd.f32 0.0, %v1413
        %v1415 = vpop.f32.mrb[0].mxu0
        %1416 = vmatprep.mubr.f32.mxu0 0.0
        %1417 = vmatmul.mubr.f32.gmra.mrb[0].mxu0 %v1268
        %v1418 = vpop.f32.mrb[0].mxu0
        %v1419 = vadd.f32 0.0, %v1418
        %v1420 = vpop.f32.mrb[0].mxu0
        %1421 = vmatprep.mubr.f32.mxu0 0.0
        %1422 = vmatmul.mubr.f32.gmra.mrb[0].mxu0 %v1269
        %v1423 = vpop.f32.mrb[0].mxu0
        %v1424 = vadd.f32 0.0, %v1423
        %v1425 = vpop.f32.mrb[0].mxu0
        %1426 = vmatprep.mubr.f32.mxu0 0.0
        %1427 = vmatmul.mubr.f32.gmra.mrb[0].mxu0 %v1270
        %v1428 = vpop.f32.mrb[0].mxu0
        %v1429 = vadd.f32 0.0, %v1428
        %v1430 = vpop.f32.mrb[0].mxu0
        %1431 = vmatprep.mubr.f32.mxu0 0.0
        %1432 = vmatmul.mubr.f32.gmra.mrb[0].mxu0 %v1271
        %v1433 = vpop.f32.mrb[0].mxu0
        %v1434 = vadd.f32 0.0, %v1433
        %v1435 = vpop.f32.mrb[0].mxu0
        %1436 = vmatprep.mubr.f32.mxu0 0.0
        %1437 = vmatmul.mubr.f32.gmra.mrb[0].mxu0 %v1272
        %v1438 = vpop.f32.mrb[0].mxu0
        %v1439 = vadd.f32 0.0, %v1438
        %v1440 = vpop.f32.mrb[0].mxu0
        %1441 = vmatprep.mubr.f32.mxu0 0.0
        %1442 = vmatmul.mubr.f32.gmra.mrb[0].mxu0 %v1273
        %v1443 = vpop.f32.mrb[0].mxu0
        %v1444 = vadd.f32 0.0, %v1443
        %v1445 = vpop.f32.mrb[0].mxu0
        %1446 = vmatprep.mubr.f32.mxu0 0.0
        %1447 = vmatmul.mubr.f32.gmra.mrb[0].mxu0 %v1274
        %v1448 = vpop.f32.mrb[0].mxu0
        %v1449 = vadd.f32 0.0, %v1448
        %v1450 = vpop.f32.mrb[0].mxu0
        %1451 = vmatprep.mubr.f32.mxu0 0.0
        %1452 = vmatmul.mubr.f32.gmra.mrb[0].mxu0 %v1291
        %v1453 = vpop.f32.mrb[0].mxu0
        %v1454 = vadd.f32 0.0, %v1453
        %v1455 = vpop.f32.mrb[0].mxu0
        %1456 = vmatprep.mubr.f32.mxu0 0.0
        %1457 = vmatmul.mubr.f32.gmra.mrb[0].mxu0 %v1292
        %v1458 = vpop.f32.mrb[0].mxu0
        %v1459 = vadd.f32 0.0, %v1458
        %v1460 = vpop.f32.mrb[0].mxu0
        %1461 = vmatprep.mubr.f32.mxu0 0.0
        %1462 = vmatmul.mubr.f32.gmra.mrb[0].mxu0 %v1293
        %v1463 = vpop.f32.mrb[0].mxu0
        %v1464 = vadd.f32 0.0, %v1463
        %v1465 = vpop.f32.mrb[0].mxu0
        %1466 = vmatprep.mubr.f32.mxu0 0.0
        %1467 = vmatmul.mubr.f32.gmra.mrb[0].mxu0 %v1294
        %v1468 = vpop.f32.mrb[0].mxu0
        %v1469 = vadd.f32 0.0, %v1468
        %v1470 = vpop.f32.mrb[0].mxu0
        %1471 = vmatprep.mubr.f32.mxu0 0.0
        %1472 = vmatmul.mubr.f32.gmra.mrb[0].mxu0 %v1295
        %v1473 = vpop.f32.mrb[0].mxu0
        %v1474 = vadd.f32 0.0, %v1473
        %v1475 = vpop.f32.mrb[0].mxu0
        %1476 = vmatprep.mubr.f32.mxu0 0.0
        %1477 = vmatmul.mubr.f32.gmra.mrb[0].mxu0 %v1296
        %v1478 = vpop.f32.mrb[0].mxu0
        %v1479 = vadd.f32 0.0, %v1478
        %v1480 = vpop.f32.mrb[0].mxu0
        %1481 = vmatprep.mubr.f32.mxu0 0.0
        %1482 = vmatmul.mubr.f32.gmra.mrb[0].mxu0 %v1297
        %v1483 = vpop.f32.mrb[0].mxu0
        %v1484 = vadd.f32 0.0, %v1483
        %v1485 = vpop.f32.mrb[0].mxu0
        %1486 = vmatprep.mubr.f32.mxu0 0.0
        %1487 = vmatmul.mubr.f32.gmra.mrb[0].mxu0 %v1298
        %v1488 = vpop.f32.mrb[0].mxu0
        %v1489 = vadd.f32 0.0, %v1488
        %v1490 = vpop.f32.mrb[0].mxu0
        %1491 = vmatprep.mubr.f32.mxu0 0.0
        %1492 = vmatmul.mubr.f32.gmra.mrb[0].mxu0 %v1299
        %v1493 = vpop.f32.mrb[0].mxu0
        %v1494 = vadd.f32 0.0, %v1493
        %v1495 = vpop.f32.mrb[0].mxu0
        %1496 = vmatprep.mubr.f32.mxu0 0.0
        %1497 = vmatmul.mubr.f32.gmra.mrb[0].mxu0 %v1300
        %v1498 = vpop.f32.mrb[0].mxu0
        %v1499 = vadd.f32 0.0, %v1498
        %v1500 = vpop.f32.mrb[0].mxu0
        %1501 = vmatprep.mubr.f32.mxu0 0.0
        %1502 = vmatmul.mubr.f32.gmra.mrb[0].mxu0 %v1301
        %v1503 = vpop.f32.mrb[0].mxu0
        %v1504 = vadd.f32 0.0, %v1503
        %v1505 = vpop.f32.mrb[0].mxu0
        %1506 = vmatprep.mubr.f32.mxu0 0.0
        %1507 = vmatmul.mubr.f32.gmra.mrb[0].mxu0 %v1302
        %v1508 = vpop.f32.mrb[0].mxu0
        %v1509 = vadd.f32 0.0, %v1508
        %v1510 = vpop.f32.mrb[0].mxu0
        %1511 = vmatprep.mubr.f32.mxu0 0.0
        %1512 = vmatmul.mubr.f32.gmra.mrb[0].mxu0 %v1303
        %v1513 = vpop.f32.mrb[0].mxu0
        %v1514 = vadd.f32 0.0, %v1513
        %v1515 = vpop.f32.mrb[0].mxu0
        %1516 = vmatprep.mubr.f32.mxu0 0.0
        %1517 = vmatmul.mubr.f32.gmra.mrb[0].mxu0 %v1304
        %v1518 = vpop.f32.mrb[0].mxu0
        %v1519 = vadd.f32 0.0, %v1518
        %v1520 = vpop.f32.mrb[0].mxu0
        %1521 = vmatprep.mubr.f32.mxu0 0.0
        %1522 = vmatmul.mubr.f32.gmra.mrb[0].mxu0 %v1305
        %v1523 = vpop.f32.mrb[0].mxu0
        %v1524 = vadd.f32 0.0, %v1523
        %v1525 = vpop.f32.mrb[0].mxu0
        %1526 = vmatprep.mubr.f32.mxu0 0.0
        %1527 = vmatmul.mubr.f32.gmra.mrb[0].mxu0 %v1306
        %v1528 = vpop.f32.mrb[0].mxu0
        %v1529 = vadd.f32 0.0, %v1528
        %v1530 = vpop.f32.mrb[0].mxu0
        %1531 = vdwg.mxu0
        %1532 = vxpose.xlu0.b32.start [1/16] %v1021, 128
        %1533 = vxpose.xlu0.b32.cont [2/16] %v1027, 128
        %1534 = vxpose.xlu0.b32.cont [3/16] %v1033, 128
        %1535 = vxpose.xlu0.b32.cont [4/16] %v1039, 128
        %1536 = vxpose.xlu0.b32.cont [5/16] %v1045, 128
        %1537 = vxpose.xlu0.b32.cont [6/16] %v1051, 128
        %1538 = vxpose.xlu0.b32.cont [7/16] %v1057, 128
        %1539 = vxpose.xlu0.b32.cont [8/16] %v1063, 128
        %1540 = vxpose.xlu0.b32.cont [9/16] %v1069, 128
        %1541 = vxpose.xlu0.b32.cont [10/16] %v1075, 128
        %1542 = vxpose.xlu0.b32.cont [11/16] %v1081, 128
        %1543 = vxpose.xlu0.b32.cont [12/16] %v1087, 128
        %1544 = vxpose.xlu0.b32.cont [13/16] %v1093, 128
        %1545 = vxpose.xlu0.b32.cont [14/16] %v1099, 128
        %1546 = vxpose.xlu0.b32.cont [15/16] %v1105, 128
        %1547 = vxpose.xlu0.b32.end [16/16] %v1111, 128
        %v1548 = vpop.trf.xlu0
        %v1549 = vpop.trf.xlu0
        %v1550 = vpop.trf.xlu0
        %v1551 = vpop.trf.xlu0
        %v1552 = vpop.trf.xlu0
        %v1553 = vpop.trf.xlu0
        %v1554 = vpop.trf.xlu0
        %v1555 = vpop.trf.xlu0
        %v1556 = vpop.trf.xlu0
        %v1557 = vpop.trf.xlu0
        %v1558 = vpop.trf.xlu0
        %v1559 = vpop.trf.xlu0
        %v1560 = vpop.trf.xlu0
        %v1561 = vpop.trf.xlu0
        %v1562 = vpop.trf.xlu0
        %v1563 = vpop.trf.xlu0
        %1564 = vxpose.xlu0.b32.start [1/16] %v1117, 128
        %1565 = vxpose.xlu0.b32.cont [2/16] %v1123, 128
        %1566 = vxpose.xlu0.b32.cont [3/16] %v1129, 128
        %1567 = vxpose.xlu0.b32.cont [4/16] %v1135, 128
        %1568 = vxpose.xlu0.b32.cont [5/16] %v1141, 128
        %1569 = vxpose.xlu0.b32.cont [6/16] %v1147, 128
        %1570 = vxpose.xlu0.b32.cont [7/16] %v1153, 128
        %1571 = vxpose.xlu0.b32.cont [8/16] %v1159, 128
        %1572 = vxpose.xlu0.b32.cont [9/16] %v1165, 128
        %1573 = vxpose.xlu0.b32.cont [10/16] %v1171, 128
        %1574 = vxpose.xlu0.b32.cont [11/16] %v1177, 128
        %1575 = vxpose.xlu0.b32.cont [12/16] %v1183, 128
        %1576 = vxpose.xlu0.b32.cont [13/16] %v1189, 128
        %1577 = vxpose.xlu0.b32.cont [14/16] %v1195, 128
        %1578 = vxpose.xlu0.b32.cont [15/16] %v1201, 128
        %1579 = vxpose.xlu0.b32.end [16/16] %v1207, 128
        %v1580 = vpop.trf.xlu0
        %v1581 = vpop.trf.xlu0
        %v1582 = vpop.trf.xlu0
        %v1583 = vpop.trf.xlu0
        %v1584 = vpop.trf.xlu0
        %v1585 = vpop.trf.xlu0
        %v1586 = vpop.trf.xlu0
        %v1587 = vpop.trf.xlu0
        %v1588 = vpop.trf.xlu0
        %v1589 = vpop.trf.xlu0
        %v1590 = vpop.trf.xlu0
        %v1591 = vpop.trf.xlu0
        %v1592 = vpop.trf.xlu0
        %v1593 = vpop.trf.xlu0
        %v1594 = vpop.trf.xlu0
        %v1595 = vpop.trf.xlu0
        %1596 = vmatprep.subr.mxu0 0.0
        %1597 = vmatpush1.xpose.msra.mxu0 %v1211
        %1598 = vmatprep.subr.mxu0 0.0
        %1599 = vmatpush1.xpose.msra.mxu0 %v1212
        %1600 = vmatprep.subr.mxu0 0.0
        %1601 = vmatpush1.xpose.msra.mxu0 %v1213
        %1602 = vmatprep.subr.mxu0 0.0
        %1603 = vmatpush1.xpose.msra.mxu0 %v1214
        %1604 = vmatprep.subr.mxu0 0.0
        %1605 = vmatpush1.xpose.msra.mxu0 %v1215
        %1606 = vmatprep.subr.mxu0 0.0
        %1607 = vmatpush1.xpose.msra.mxu0 %v1216
        %1608 = vmatprep.subr.mxu0 0.0
        %1609 = vmatpush1.xpose.msra.mxu0 %v1217
        %1610 = vmatprep.subr.mxu0 0.0
        %1611 = vmatpush1.xpose.msra.mxu0 %v1218
        %1612 = vmatprep.subr.mxu0 0.0
        %1613 = vmatpush1.xpose.msra.mxu0 %v1219
        %1614 = vmatprep.subr.mxu0 0.0
        %1615 = vmatpush1.xpose.msra.mxu0 %v1220
        %1616 = vmatprep.subr.mxu0 0.0
        %1617 = vmatpush1.xpose.msra.mxu0 %v1221
        %1618 = vmatprep.subr.mxu0 0.0
        %1619 = vmatpush1.xpose.msra.mxu0 %v1222
        %1620 = vmatprep.subr.mxu0 0.0
        %1621 = vmatpush1.xpose.msra.mxu0 %v1223
        %1622 = vmatprep.subr.mxu0 0.0
        %1623 = vmatpush1.xpose.msra.mxu0 %v1224
        %1624 = vmatprep.subr.mxu0 0.0
        %1625 = vmatpush1.xpose.msra.mxu0 %v1225
        %1626 = vmatprep.subr.mxu0 0.0
        %1627 = vmatpush1.xpose.msra.mxu0 %v1226
        %1628 = vmatprep.subr.mxu0 0.0
        %1629 = vmatpush1.xpose.msra.mxu0 0.0
        %1630 = vmatprep.subr.mxu0 0.0
        %1631 = vmatpush1.xpose.msra.mxu0 0.0
        %1632 = vmatprep.subr.mxu0 0.0
        %1633 = vmatpush1.xpose.msra.mxu0 0.0
        %1634 = vmatprep.subr.mxu0 0.0
        %1635 = vmatpush1.xpose.msra.mxu0 0.0
        %1636 = vmatprep.subr.mxu0 0.0
        %1637 = vmatpush1.xpose.msra.mxu0 0.0
        %1638 = vmatprep.subr.mxu0 0.0
        %1639 = vmatpush1.xpose.msra.mxu0 0.0
        %1640 = vmatprep.subr.mxu0 0.0
        %1641 = vmatpush1.xpose.msra.mxu0 0.0
        %1642 = vmatprep.subr.mxu0 0.0
        %1643 = vmatpush1.xpose.msra.mxu0 0.0
        %1644 = vmatprep.subr.mxu0 0.0
        %1645 = vmatpush1.xpose.msra.mxu0 0.0
        %1646 = vmatprep.subr.mxu0 0.0
        %1647 = vmatpush1.xpose.msra.mxu0 0.0
        %1648 = vmatprep.subr.mxu0 0.0
        %1649 = vmatpush1.xpose.msra.mxu0 0.0
        %1650 = vmatprep.subr.mxu0 0.0
        %1651 = vmatpush1.xpose.msra.mxu0 0.0
        %1652 = vmatprep.subr.mxu0 0.0
        %1653 = vmatpush1.xpose.msra.mxu0 0.0
        %1654 = vmatprep.subr.mxu0 0.0
        %1655 = vmatpush1.xpose.msra.mxu0 0.0
        %1656 = vmatprep.subr.mxu0 0.0
        %1657 = vmatpush1.xpose.msra.mxu0 0.0
        %1658 = vmatprep.subr.mxu0 0.0
        %1659 = vmatpush1.xpose.msra.mxu0 0.0
        %1660 = vmatprep.mubr.f32.mxu0 0.0
        %1661 = vmatmul.mubr.f32.gmra.mrb[0].mxu0 %v1548
        %v1662 = vpop.f32.mrb[0].mxu0
        %v1663 = vadd.f32 %v1374, %v1662
        %v1664 = vpop.f32.mrb[0].mxu0
        %1665 = vmatprep.mubr.f32.mxu0 0.0
        %1666 = vmatmul.mubr.f32.gmra.mrb[0].mxu0 %v1549
        %v1667 = vpop.f32.mrb[0].mxu0
        %v1668 = vadd.f32 %v1379, %v1667
        %v1669 = vpop.f32.mrb[0].mxu0
        %1670 = vmatprep.mubr.f32.mxu0 0.0
        %1671 = vmatmul.mubr.f32.gmra.mrb[0].mxu0 %v1550
        %v1672 = vpop.f32.mrb[0].mxu0
        %v1673 = vadd.f32 %v1384, %v1672
        %v1674 = vpop.f32.mrb[0].mxu0
        %1675 = vmatprep.mubr.f32.mxu0 0.0
        %1676 = vmatmul.mubr.f32.gmra.mrb[0].mxu0 %v1551
        %v1677 = vpop.f32.mrb[0].mxu0
        %v1678 = vadd.f32 %v1389, %v1677
        %v1679 = vpop.f32.mrb[0].mxu0
        %1680 = vmatprep.mubr.f32.mxu0 0.0
        %1681 = vmatmul.mubr.f32.gmra.mrb[0].mxu0 %v1552
        %v1682 = vpop.f32.mrb[0].mxu0
        %v1683 = vadd.f32 %v1394, %v1682
        %v1684 = vpop.f32.mrb[0].mxu0
        %1685 = vmatprep.mubr.f32.mxu0 0.0
        %1686 = vmatmul.mubr.f32.gmra.mrb[0].mxu0 %v1553
        %v1687 = vpop.f32.mrb[0].mxu0
        %v1688 = vadd.f32 %v1399, %v1687
        %v1689 = vpop.f32.mrb[0].mxu0
        %1690 = vmatprep.mubr.f32.mxu0 0.0
        %1691 = vmatmul.mubr.f32.gmra.mrb[0].mxu0 %v1554
        %v1692 = vpop.f32.mrb[0].mxu0
        %v1693 = vadd.f32 %v1404, %v1692
        %v1694 = vpop.f32.mrb[0].mxu0
        %1695 = vmatprep.mubr.f32.mxu0 0.0
        %1696 = vmatmul.mubr.f32.gmra.mrb[0].mxu0 %v1555
        %v1697 = vpop.f32.mrb[0].mxu0
        %v1698 = vadd.f32 %v1409, %v1697
        %v1699 = vpop.f32.mrb[0].mxu0
        %1700 = vmatprep.mubr.f32.mxu0 0.0
        %1701 = vmatmul.mubr.f32.gmra.mrb[0].mxu0 %v1556
        %v1702 = vpop.f32.mrb[0].mxu0
        %v1703 = vadd.f32 %v1414, %v1702
        %v1704 = vpop.f32.mrb[0].mxu0
        %1705 = vmatprep.mubr.f32.mxu0 0.0
        %1706 = vmatmul.mubr.f32.gmra.mrb[0].mxu0 %v1557
        %v1707 = vpop.f32.mrb[0].mxu0
        %v1708 = vadd.f32 %v1419, %v1707
        %v1709 = vpop.f32.mrb[0].mxu0
        %1710 = vmatprep.mubr.f32.mxu0 0.0
        %1711 = vmatmul.mubr.f32.gmra.mrb[0].mxu0 %v1558
        %v1712 = vpop.f32.mrb[0].mxu0
        %v1713 = vadd.f32 %v1424, %v1712
        %v1714 = vpop.f32.mrb[0].mxu0
        %1715 = vmatprep.mubr.f32.mxu0 0.0
        %1716 = vmatmul.mubr.f32.gmra.mrb[0].mxu0 %v1559
        %v1717 = vpop.f32.mrb[0].mxu0
        %v1718 = vadd.f32 %v1429, %v1717
        %v1719 = vpop.f32.mrb[0].mxu0
        %1720 = vmatprep.mubr.f32.mxu0 0.0
        %1721 = vmatmul.mubr.f32.gmra.mrb[0].mxu0 %v1560
        %v1722 = vpop.f32.mrb[0].mxu0
        %v1723 = vadd.f32 %v1434, %v1722
        %v1724 = vpop.f32.mrb[0].mxu0
        %1725 = vmatprep.mubr.f32.mxu0 0.0
        %1726 = vmatmul.mubr.f32.gmra.mrb[0].mxu0 %v1561
        %v1727 = vpop.f32.mrb[0].mxu0
        %v1728 = vadd.f32 %v1439, %v1727
        %v1729 = vpop.f32.mrb[0].mxu0
        %1730 = vmatprep.mubr.f32.mxu0 0.0
        %1731 = vmatmul.mubr.f32.gmra.mrb[0].mxu0 %v1562
        %v1732 = vpop.f32.mrb[0].mxu0
        %v1733 = vadd.f32 %v1444, %v1732
        %v1734 = vpop.f32.mrb[0].mxu0
        %1735 = vmatprep.mubr.f32.mxu0 0.0
        %1736 = vmatmul.mubr.f32.gmra.mrb[0].mxu0 %v1563
        %v1737 = vpop.f32.mrb[0].mxu0
        %v1738 = vadd.f32 %v1449, %v1737
        %v1739 = vpop.f32.mrb[0].mxu0
        %1740 = vmatprep.mubr.f32.mxu0 0.0
        %1741 = vmatmul.mubr.f32.gmra.mrb[0].mxu0 %v1580
        %v1742 = vpop.f32.mrb[0].mxu0
        %v1743 = vadd.f32 %v1454, %v1742
        %v1744 = vpop.f32.mrb[0].mxu0
        %1745 = vmatprep.mubr.f32.mxu0 0.0
        %1746 = vmatmul.mubr.f32.gmra.mrb[0].mxu0 %v1581
        %v1747 = vpop.f32.mrb[0].mxu0
        %v1748 = vadd.f32 %v1459, %v1747
        %v1749 = vpop.f32.mrb[0].mxu0
        %1750 = vmatprep.mubr.f32.mxu0 0.0
        %1751 = vmatmul.mubr.f32.gmra.mrb[0].mxu0 %v1582
        %v1752 = vpop.f32.mrb[0].mxu0
        %v1753 = vadd.f32 %v1464, %v1752
        %v1754 = vpop.f32.mrb[0].mxu0
        %1755 = vmatprep.mubr.f32.mxu0 0.0
        %1756 = vmatmul.mubr.f32.gmra.mrb[0].mxu0 %v1583
        %v1757 = vpop.f32.mrb[0].mxu0
        %v1758 = vadd.f32 %v1469, %v1757
        %v1759 = vpop.f32.mrb[0].mxu0
        %1760 = vmatprep.mubr.f32.mxu0 0.0
        %1761 = vmatmul.mubr.f32.gmra.mrb[0].mxu0 %v1584
        %v1762 = vpop.f32.mrb[0].mxu0
        %v1763 = vadd.f32 %v1474, %v1762
        %v1764 = vpop.f32.mrb[0].mxu0
        %1765 = vmatprep.mubr.f32.mxu0 0.0
        %1766 = vmatmul.mubr.f32.gmra.mrb[0].mxu0 %v1585
        %v1767 = vpop.f32.mrb[0].mxu0
        %v1768 = vadd.f32 %v1479, %v1767
        %v1769 = vpop.f32.mrb[0].mxu0
        %1770 = vmatprep.mubr.f32.mxu0 0.0
        %1771 = vmatmul.mubr.f32.gmra.mrb[0].mxu0 %v1586
        %v1772 = vpop.f32.mrb[0].mxu0
        %v1773 = vadd.f32 %v1484, %v1772
        %v1774 = vpop.f32.mrb[0].mxu0
        %1775 = vmatprep.mubr.f32.mxu0 0.0
        %1776 = vmatmul.mubr.f32.gmra.mrb[0].mxu0 %v1587
        %v1777 = vpop.f32.mrb[0].mxu0
        %v1778 = vadd.f32 %v1489, %v1777
        %v1779 = vpop.f32.mrb[0].mxu0
        %1780 = vmatprep.mubr.f32.mxu0 0.0
        %1781 = vmatmul.mubr.f32.gmra.mrb[0].mxu0 %v1588
        %v1782 = vpop.f32.mrb[0].mxu0
        %v1783 = vadd.f32 %v1494, %v1782
        %v1784 = vpop.f32.mrb[0].mxu0
        %1785 = vmatprep.mubr.f32.mxu0 0.0
        %1786 = vmatmul.mubr.f32.gmra.mrb[0].mxu0 %v1589
        %v1787 = vpop.f32.mrb[0].mxu0
        %v1788 = vadd.f32 %v1499, %v1787
        %v1789 = vpop.f32.mrb[0].mxu0
        %1790 = vmatprep.mubr.f32.mxu0 0.0
        %1791 = vmatmul.mubr.f32.gmra.mrb[0].mxu0 %v1590
        %v1792 = vpop.f32.mrb[0].mxu0
        %v1793 = vadd.f32 %v1504, %v1792
        %v1794 = vpop.f32.mrb[0].mxu0
        %1795 = vmatprep.mubr.f32.mxu0 0.0
        %1796 = vmatmul.mubr.f32.gmra.mrb[0].mxu0 %v1591
        %v1797 = vpop.f32.mrb[0].mxu0
        %v1798 = vadd.f32 %v1509, %v1797
        %v1799 = vpop.f32.mrb[0].mxu0
        %1800 = vmatprep.mubr.f32.mxu0 0.0
        %1801 = vmatmul.mubr.f32.gmra.mrb[0].mxu0 %v1592
        %v1802 = vpop.f32.mrb[0].mxu0
        %v1803 = vadd.f32 %v1514, %v1802
        %v1804 = vpop.f32.mrb[0].mxu0
        %1805 = vmatprep.mubr.f32.mxu0 0.0
        %1806 = vmatmul.mubr.f32.gmra.mrb[0].mxu0 %v1593
        %v1807 = vpop.f32.mrb[0].mxu0
        %v1808 = vadd.f32 %v1519, %v1807
        %v1809 = vpop.f32.mrb[0].mxu0
        %1810 = vmatprep.mubr.f32.mxu0 0.0
        %1811 = vmatmul.mubr.f32.gmra.mrb[0].mxu0 %v1594
        %v1812 = vpop.f32.mrb[0].mxu0
        %v1813 = vadd.f32 %v1524, %v1812
        %v1814 = vpop.f32.mrb[0].mxu0
        %1815 = vmatprep.mubr.f32.mxu0 0.0
        %1816 = vmatmul.mubr.f32.gmra.mrb[0].mxu0 %v1595
        %v1817 = vpop.f32.mrb[0].mxu0
        %v1818 = vadd.f32 %v1529, %v1817
        %v1819 = vpop.f32.mrb[0].mxu0
        %1820 = vdwg.mxu0
        %v1821 = vld [vmem:[#allocation2] sm:$0xff]
        %v1822 = vld [vmem:[#allocation2 + $0x8] sm:$0xff]
        %v1823 = vld [vmem:[#allocation2 + $0x10] sm:$0xff]
        %v1824 = vld [vmem:[#allocation2 + $0x18] sm:$0xff]
        %1825 = vmatprep.subr.mxu0 0.0
        %1826 = vmatpush1.xpose.msra.mxu0 %v1663
        %1827 = vmatprep.subr.mxu0 0.0
        %1828 = vmatpush1.xpose.msra.mxu0 %v1668
        %1829 = vmatprep.subr.mxu0 0.0
        %1830 = vmatpush1.xpose.msra.mxu0 %v1673
        %1831 = vmatprep.subr.mxu0 0.0
        %1832 = vmatpush1.xpose.msra.mxu0 %v1678
        %1833 = vmatprep.subr.mxu0 0.0
        %1834 = vmatpush1.xpose.msra.mxu0 %v1683
        %1835 = vmatprep.subr.mxu0 0.0
        %1836 = vmatpush1.xpose.msra.mxu0 %v1688
        %1837 = vmatprep.subr.mxu0 0.0
        %1838 = vmatpush1.xpose.msra.mxu0 %v1693
        %1839 = vmatprep.subr.mxu0 0.0
        %1840 = vmatpush1.xpose.msra.mxu0 %v1698
        %1841 = vmatprep.subr.mxu0 0.0
        %1842 = vmatpush1.xpose.msra.mxu0 %v1703
        %1843 = vmatprep.subr.mxu0 0.0
        %1844 = vmatpush1.xpose.msra.mxu0 %v1708
        %1845 = vmatprep.subr.mxu0 0.0
        %1846 = vmatpush1.xpose.msra.mxu0 %v1713
        %1847 = vmatprep.subr.mxu0 0.0
        %1848 = vmatpush1.xpose.msra.mxu0 %v1718
        %1849 = vmatprep.subr.mxu0 0.0
        %1850 = vmatpush1.xpose.msra.mxu0 %v1723
        %1851 = vmatprep.subr.mxu0 0.0
        %1852 = vmatpush1.xpose.msra.mxu0 %v1728
        %1853 = vmatprep.subr.mxu0 0.0
        %1854 = vmatpush1.xpose.msra.mxu0 %v1733
        %1855 = vmatprep.subr.mxu0 0.0
        %1856 = vmatpush1.xpose.msra.mxu0 %v1738
        %1857 = vmatprep.subr.mxu0 0.0
        %1858 = vmatpush1.xpose.msra.mxu0 0.0
        %1859 = vmatprep.subr.mxu0 0.0
        %1860 = vmatpush1.xpose.msra.mxu0 0.0
        %1861 = vmatprep.subr.mxu0 0.0
        %1862 = vmatpush1.xpose.msra.mxu0 0.0
        %1863 = vmatprep.subr.mxu0 0.0
        %1864 = vmatpush1.xpose.msra.mxu0 0.0
        %1865 = vmatprep.subr.mxu0 0.0
        %1866 = vmatpush1.xpose.msra.mxu0 0.0
        %1867 = vmatprep.subr.mxu0 0.0
        %1868 = vmatpush1.xpose.msra.mxu0 0.0
        %1869 = vmatprep.subr.mxu0 0.0
        %1870 = vmatpush1.xpose.msra.mxu0 0.0
        %1871 = vmatprep.subr.mxu0 0.0
        %1872 = vmatpush1.xpose.msra.mxu0 0.0
        %1873 = vmatprep.subr.mxu0 0.0
        %1874 = vmatpush1.xpose.msra.mxu0 0.0
        %1875 = vmatprep.subr.mxu0 0.0
        %1876 = vmatpush1.xpose.msra.mxu0 0.0
        %1877 = vmatprep.subr.mxu0 0.0
        %1878 = vmatpush1.xpose.msra.mxu0 0.0
        %1879 = vmatprep.subr.mxu0 0.0
        %1880 = vmatpush1.xpose.msra.mxu0 0.0
        %1881 = vmatprep.subr.mxu0 0.0
        %1882 = vmatpush1.xpose.msra.mxu0 0.0
        %1883 = vmatprep.subr.mxu0 0.0
        %1884 = vmatpush1.xpose.msra.mxu0 0.0
        %1885 = vmatprep.subr.mxu0 0.0
        %1886 = vmatpush1.xpose.msra.mxu0 0.0
        %1887 = vmatprep.subr.mxu0 0.0
        %1888 = vmatpush1.xpose.msra.mxu0 0.0
        %1889 = vmatprep.mubr.f32.mxu0 0.0
        %1890 = vmatmul.mubr.f32.gmra.mrb[0].mxu0 %v269
        %v1891 = vpop.f32.mrb[0].mxu0
        %v1892 = vadd.f32 0.0, %v1891
        %v1893 = vpop.f32.mrb[0].mxu0
        %1894 = vmatprep.mubr.f32.mxu0 0.0
        %1895 = vmatmul.mubr.f32.gmra.mrb[0].mxu0 %v270
        %v1896 = vpop.f32.mrb[0].mxu0
        %v1897 = vadd.f32 0.0, %v1896
        %v1898 = vpop.f32.mrb[0].mxu0
        %1899 = vdwg.mxu0
        %1900 = vmatprep.subr.mxu0 0.0
        %1901 = vmatpush1.xpose.msra.mxu0 %v1743
        %1902 = vmatprep.subr.mxu0 0.0
        %1903 = vmatpush1.xpose.msra.mxu0 %v1748
        %1904 = vmatprep.subr.mxu0 0.0
        %1905 = vmatpush1.xpose.msra.mxu0 %v1753
        %1906 = vmatprep.subr.mxu0 0.0
        %1907 = vmatpush1.xpose.msra.mxu0 %v1758
        %1908 = vmatprep.subr.mxu0 0.0
        %1909 = vmatpush1.xpose.msra.mxu0 %v1763
        %1910 = vmatprep.subr.mxu0 0.0
        %1911 = vmatpush1.xpose.msra.mxu0 %v1768
        %1912 = vmatprep.subr.mxu0 0.0
        %1913 = vmatpush1.xpose.msra.mxu0 %v1773
        %1914 = vmatprep.subr.mxu0 0.0
        %1915 = vmatpush1.xpose.msra.mxu0 %v1778
        %1916 = vmatprep.subr.mxu0 0.0
        %1917 = vmatpush1.xpose.msra.mxu0 %v1783
        %1918 = vmatprep.subr.mxu0 0.0
        %1919 = vmatpush1.xpose.msra.mxu0 %v1788
        %1920 = vmatprep.subr.mxu0 0.0
        %1921 = vmatpush1.xpose.msra.mxu0 %v1793
        %1922 = vmatprep.subr.mxu0 0.0
        %1923 = vmatpush1.xpose.msra.mxu0 %v1798
        %1924 = vmatprep.subr.mxu0 0.0
        %1925 = vmatpush1.xpose.msra.mxu0 %v1803
        %1926 = vmatprep.subr.mxu0 0.0
        %1927 = vmatpush1.xpose.msra.mxu0 %v1808
        %1928 = vmatprep.subr.mxu0 0.0
        %1929 = vmatpush1.xpose.msra.mxu0 %v1813
        %1930 = vmatprep.subr.mxu0 0.0
        %1931 = vmatpush1.xpose.msra.mxu0 %v1818
        %1932 = vmatprep.subr.mxu0 0.0
        %1933 = vmatpush1.xpose.msra.mxu0 0.0
        %1934 = vmatprep.subr.mxu0 0.0
        %1935 = vmatpush1.xpose.msra.mxu0 0.0
        %1936 = vmatprep.subr.mxu0 0.0
        %1937 = vmatpush1.xpose.msra.mxu0 0.0
        %1938 = vmatprep.subr.mxu0 0.0
        %1939 = vmatpush1.xpose.msra.mxu0 0.0
        %1940 = vmatprep.subr.mxu0 0.0
        %1941 = vmatpush1.xpose.msra.mxu0 0.0
        %1942 = vmatprep.subr.mxu0 0.0
        %1943 = vmatpush1.xpose.msra.mxu0 0.0
        %1944 = vmatprep.subr.mxu0 0.0
        %1945 = vmatpush1.xpose.msra.mxu0 0.0
        %1946 = vmatprep.subr.mxu0 0.0
        %1947 = vmatpush1.xpose.msra.mxu0 0.0
        %1948 = vmatprep.subr.mxu0 0.0
        %1949 = vmatpush1.xpose.msra.mxu0 0.0
        %1950 = vmatprep.subr.mxu0 0.0
        %1951 = vmatpush1.xpose.msra.mxu0 0.0
        %1952 = vmatprep.subr.mxu0 0.0
        %1953 = vmatpush1.xpose.msra.mxu0 0.0
        %1954 = vmatprep.subr.mxu0 0.0
        %1955 = vmatpush1.xpose.msra.mxu0 0.0
        %1956 = vmatprep.subr.mxu0 0.0
        %1957 = vmatpush1.xpose.msra.mxu0 0.0
        %1958 = vmatprep.subr.mxu0 0.0
        %1959 = vmatpush1.xpose.msra.mxu0 0.0
        %1960 = vmatprep.subr.mxu0 0.0
        %1961 = vmatpush1.xpose.msra.mxu0 0.0
        %1962 = vmatprep.subr.mxu0 0.0
        %1963 = vmatpush1.xpose.msra.mxu0 0.0
        %1964 = vmatprep.mubr.f32.mxu0 0.0
        %1965 = vmatmul.mubr.f32.gmra.mrb[0].mxu0 %v271
        %v1966 = vpop.f32.mrb[0].mxu0
        %v1967 = vadd.f32 0.0, %v1966
        %v1968 = vpop.f32.mrb[0].mxu0
        %1969 = vmatprep.mubr.f32.mxu0 0.0
        %1970 = vmatmul.mubr.f32.gmra.mrb[0].mxu0 %v272
        %v1971 = vpop.f32.mrb[0].mxu0
        %v1972 = vadd.f32 0.0, %v1971
        %v1973 = vpop.f32.mrb[0].mxu0
        %1974 = vdwg.mxu0
        %v1975 = vadd.f32 %v1821, %v1892
        %v1976 = vadd.f32 %v1822, %v1897
        %v1977 = vadd.f32 %v1823, %v1967
        %v1978 = vadd.f32 %v1824, %v1972
        %1979 = vst [vmem:[#allocation2] sm:$0xff] %v1975
        %1980 = vst [vmem:[#allocation2 + $0x8] sm:$0xff] %v1976
        %1981 = vst [vmem:[#allocation2 + $0x10] sm:$0xff] %v1977
        %1982 = vst [vmem:[#allocation2 + $0x18] sm:$0xff] %v1978
        %p1983 = scmp.eq.s32.totalorder %s24, 1
        // Predicated region
        $region49: #{tpu_custom_call.1} parent=31 // pred_check
          %p1984 = pneg %p1983
        $region50: #{tpu_custom_call.1} parent=31 // pred_check_branch
          %1986 = sbr.rel (%p1984) target = $region52
        $region51: #{tpu_custom_call.1} parent=31 // pred_region
          %v1987 = vld [vmem:[#allocation2] sm:$0xff]
          %v1988 = vld [vmem:[#allocation2 + $0x8] sm:$0xff]
          %v1989 = vld [vmem:[#allocation2 + $0x10] sm:$0xff]
          %v1990 = vld [vmem:[#allocation2 + $0x18] sm:$0xff]
          %1991 = vst [vmem:[#allocation9] sm:$0xff] %v1987
          %1992 = vst [vmem:[#allocation9 + $0x8] sm:$0xff] %v1988
          %1993 = vst [vmem:[#allocation9 + $0x10] sm:$0xff] %v1989
          %1994 = vst [vmem:[#allocation9 + $0x18] sm:$0xff] %v1990
        $region52: #{tpu_custom_call.1} parent=31 // pred_fallthru
          _
        // Predicated region
        $region53: #{tpu_custom_call.1} parent=31 // pred_check
          %p1995 = pneg %p127
        $region54: #{tpu_custom_call.1} parent=31 // pred_check_branch
          %1997 = sbr.rel (%p1995) target = $region56
        $region55: #{tpu_custom_call.1} parent=31 // pred_region
          %s1998 = smul.u32 2, %s23
          %s2000 = ssub.s32 512, 512
          %2001 = vsyncadd [#allocation5], %s2000
          %s2002 = smul.addr %s1998, 2
          %s2003 = smul.addr %s2002, 128
          %s2004 = scalar_lea.hbm %s3, %s2003
          %s2005 = sshll.u32 [#allocation9], 4
          %s2006 = int_to_ptr.vmem [resolvable:$true] %s2005
          %2011 = dma.vmem_to_hbm [thread:$0]  %s2006, 512, %s2004, [#allocation5], 128, 128, 8
        $region56: #{tpu_custom_call.1} parent=31 // pred_fallthru
          _
        // Predicated region
        $region57: #{tpu_custom_call.1} parent=31 // pred_check
          %p2012 = pneg %p127
        $region58: #{tpu_custom_call.1} parent=31 // pred_check_branch
          %2014 = sbr.rel (%p2012) target = $region60
        $region59: #{tpu_custom_call.1} parent=31 // pred_region
          %2015 = dma.done [#allocation5], 512
        $region60: #{tpu_custom_call.1} parent=31 // pred_fallthru
          _
      $region32: #{tpu_custom_call.1} parent=5 // pred_fallthru
        _
      %p2016 = scmp.le.s32.totalorder 2, %s14
      // Predicated region
      $region61: #{tpu_custom_call.1} parent=5 // pred_check
        %p2017 = pneg %p2016
      $region62: #{tpu_custom_call.1} parent=5 // pred_check_branch
        %2019 = sbr.rel (%p2017) target = $region64
      $region63: #{tpu_custom_call.1} parent=5 // pred_region
        %s2020 = ssub.s32 %s14, 2
      $region64: #{tpu_custom_call.1} parent=5 // pred_fallthru
        _
    $region6: #{tpu_custom_call.1} parent=1 // loop_footer
      %s18 = sadd.s32 1, %s14
    $region7: #{tpu_custom_call.1} parent=1 // loop_footer_branch
      %13 = sbr.rel target = $region3
    $region8: #{tpu_custom_call.1} parent=1 // loop_exit
      _
    %2021 = vsyncpa [#allocation4], 1
    %s2022 = scalar_lea.sflag [#allocation4], 1
    %2023 = vsyncpa %s2022, 1
    %2024 = vsyncpa [#allocation7], 1
    %s2025 = scalar_lea.sflag [#allocation7], 1
    %2026 = vsyncpa %s2025, 1
    %2027 = vsyncpa [#allocation5], 1
    %s2028 = scalar_lea.sflag [#allocation5], 1
    %2029 = vsyncpa %s2028, 1

</llo_original>
